<compile_context>
chip_gen: v7x
topology: tpu7x:2x2x1
jax: 0.10.0
libtpu: 0.0.40
codegen_flags: <defaults>
</compile_context>

<pallas_src>
import jax
import jax.numpy as jnp
import numpy as np
from jax.experimental import pallas as pl
from jax.experimental.pallas import tpu as pltpu


# ---------------------------------------------------------------------------
# Kernels
# ---------------------------------------------------------------------------
def _transform_kernel(x_ref, w_ref, dout_ref, o_ref, acc_ref):
    """o = dout_rsqrt[:, None] * (x @ w); f32 accumulate, bf16 out."""
    k = pl.program_id(2)

    @pl.when(k == 0)
    def _():
        acc_ref[...] = jnp.zeros_like(acc_ref)

    acc_ref[...] += jnp.dot(x_ref[...], w_ref[...],
                            preferred_element_type=jnp.float32)

    @pl.when(k == pl.num_programs(2) - 1)
    def _():
        # Row-scale by d_out^{-1/2} in f32 (fused epilogue, VPU broadcast mul).
        o_ref[...] = (acc_ref[...] * dout_ref[...]).astype(o_ref.dtype)


def _aggregate_kernel(a_ref, h_ref, din_ref, b_ref, o_ref, acc_ref):
    """o = relu(din_rsqrt[:, None] * (a @ h) + b); f32 accumulate."""
    k = pl.program_id(2)

    @pl.when(k == 0)
    def _():
        acc_ref[...] = jnp.zeros_like(acc_ref)

    acc_ref[...] += jnp.dot(a_ref[...], h_ref[...],
                            preferred_element_type=jnp.float32)

    @pl.when(k == pl.num_programs(2) - 1)
    def _():
        out = acc_ref[...] * din_ref[...] + b_ref[...]
        o_ref[...] = jnp.maximum(out, 0.0).astype(o_ref.dtype)


# ---------------------------------------------------------------------------
# pallas_call wrappers
# ---------------------------------------------------------------------------
def _round_up(x, m):
    return ((x + m - 1) // m) * m


def _choose_tile(padded_dim, target):
    """Largest multiple of 128 that is <= target and divides padded_dim."""
    t = max(128, min(target, padded_dim))
    t = (t // 128) * 128
    while padded_dim % t != 0:
        t -= 128
    return t


def _matmul_call(kernel, lhs, rhs, extras, *, tm_t=256, tn_t=256, tk_t=512):
    """Shared 3-D-grid matmul launcher (reduction axis last, f32 accumulator)."""
    m, k_dim = lhs.shape
    _, n = rhs.shape
    tm = _choose_tile(m, tm_t)
    tn = _choose_tile(n, tn_t)
    tk = _choose_tile(k_dim, tk_t)
    grid = (m // tm, n // tn, k_dim // tk)

    extra_specs = []
    for arr in extras:
        if arr.shape[0] == m:            # per-row scale, shape (m, 1)
            extra_specs.append(pl.BlockSpec((tm, 1), lambda i, j, k: (i, 0)))
        else:                            # bias, shape (1, n)
            extra_specs.append(pl.BlockSpec((1, tn), lambda i, j, k: (0, j)))

    return pl.pallas_call(
        kernel,
        out_shape=jax.ShapeDtypeStruct((m, n), jnp.bfloat16),
        grid_spec=pltpu.PrefetchScalarGridSpec(
            num_scalar_prefetch=0,
            grid=grid,
            in_specs=[
                pl.BlockSpec((tm, tk), lambda i, j, k: (i, k)),
                pl.BlockSpec((tk, tn), lambda i, j, k: (k, j)),
            ] + extra_specs,
            out_specs=pl.BlockSpec((tm, tn), lambda i, j, k: (i, j)),
            scratch_shapes=[pltpu.VMEM((tm, tn), jnp.float32)],
        ),
        compiler_params=pltpu.CompilerParams(
            dimension_semantics=("parallel", "parallel", "arbitrary")),
    )(lhs, rhs, *extras)


def _transform(x, w, dout_rsqrt):
    return _matmul_call(_transform_kernel, x, w, (dout_rsqrt,))


def _aggregate(adj, h, din_rsqrt, bias):
    return _matmul_call(_aggregate_kernel, adj, h, (din_rsqrt, bias))


# ---------------------------------------------------------------------------
# Full forward pass
# ---------------------------------------------------------------------------
@jax.jit
def gcn_for_emb_forward(adj, features, weights, biases):
    """2-layer GCN_for_emb forward (eval mode).

    adj      : (N, N) float, adj[i, j] = 1 iff edge j -> i
    features : (N, F_in) float
    weights  : [ (F_in, H), (H, H) ]
    biases   : [ (H,), (H,) ]
    returns  : (N, H) float32 embeddings
    """
    n = adj.shape[0]
    f_in = features.shape[1]

    # Degree normalisation in plain XLA (f32), clamped to >= 1 before rsqrt so
    # isolated nodes still produce relu(bias), matching DGL GraphConv.
    adj_f32 = adj.astype(jnp.float32)
    d_in = jnp.maximum(jnp.sum(adj_f32, axis=1), 1.0)     # destination in-degree
    d_out = jnp.maximum(jnp.sum(adj_f32, axis=0), 1.0)    # source out-degree
    din_rsqrt = jax.lax.rsqrt(d_in)[:, None]              # (N, 1) f32
    dout_rsqrt = jax.lax.rsqrt(d_out)[:, None]            # (N, 1) f32

    # Pad everything to lane-aligned multiples of 128 (pads are zero, so they
    # never contaminate real rows/columns; padded rows are sliced off at end).
    n_p = _round_up(n, 128)
    adj_b = jnp.pad(adj.astype(jnp.bfloat16), ((0, n_p - n), (0, n_p - n)))
    din_p = jnp.pad(din_rsqrt, ((0, n_p - n), (0, 0)), constant_values=1.0)
    dout_p = jnp.pad(dout_rsqrt, ((0, n_p - n), (0, 0)), constant_values=1.0)

    f_p = _round_up(f_in, 128)
    h = jnp.pad(features.astype(jnp.bfloat16), ((0, n_p - n), (0, f_p - f_in)))

    for w, b in zip(weights, biases):
        fi, fo = w.shape
        fi_p, fo_p = _round_up(fi, 128), _round_up(fo, 128)
        w_p = jnp.pad(w.astype(jnp.bfloat16), ((0, fi_p - fi), (0, fo_p - fo)))
        b_p = jnp.pad(b.astype(jnp.float32), ((0, fo_p - fo),)).reshape(1, fo_p)

        # TODO(synk): training-mode dropout(p=0.5) between layers omitted (eval identity).
        hw = _transform(h, w_p, dout_p)           # (n_p, fo_p) bf16, rows scaled by d_out^{-1/2}
        h = _aggregate(adj_b, hw, din_p, b_p)     # (n_p, fo_p) bf16, relu(d_in^{-1/2}*(A@hw)+b)

    return h[:n, :weights[-1].shape[1]].astype(jnp.float32)


# ---------------------------------------------------------------------------
# Pure-JAX reference (f32) for correctness checking
# ---------------------------------------------------------------------------
def gcn_reference(adj, features, weights, biases):
    a = adj.astype(jnp.float32)
    d_in = jnp.maximum(a.sum(axis=1), 1.0)
    d_out = jnp.maximum(a.sum(axis=0), 1.0)
    ahat = jax.lax.rsqrt(d_in)[:, None] * a * jax.lax.rsqrt(d_out)[None, :]
    h = features.astype(jnp.float32)
    for w, b in zip(weights, biases):
        h = jnp.maximum(ahat @ (h @ w.astype(jnp.float32)) + b.astype(jnp.float32), 0.0)
    return h


# ---------------------------------------------------------------------------
if __name__ == "__main__":
    key = jax.random.PRNGKey(0)
    k_adj, k_x, k_w1, k_b1, k_w2, k_b2 = jax.random.split(key, 6)

    # Small, deliberately non-128-aligned shapes to exercise the padding path.
    num_nodes = 200
    in_feats = 96
    n_hidden = 64

    # Random sparse-ish directed graph as a dense 0/1 adjacency (A[i,j]=1: edge j->i).
    adj = (jax.random.uniform(k_adj, (num_nodes, num_nodes)) < 0.05).astype(jnp.float32)
    features = jax.random.normal(k_x, (num_nodes, in_feats), jnp.float32)
    w1 = jax.random.normal(k_w1, (in_feats, n_hidden), jnp.float32) / np.sqrt(in_feats)
    b1 = jax.random.normal(k_b1, (n_hidden,), jnp.float32) * 0.1
    w2 = jax.random.normal(k_w2, (n_hidden, n_hidden), jnp.float32) / np.sqrt(n_hidden)
    b2 = jax.random.normal(k_b2, (n_hidden,), jnp.float32) * 0.1

    out = gcn_for_emb_forward(adj, features, [w1, w2], [b1, b2])
    out = jax.block_until_ready(out)

    ref = jax.block_until_ready(gcn_reference(adj, features, [w1, w2], [b1, b2]))

    assert out.shape == (num_nodes, n_hidden), out.shape
    rel_err = float(jnp.max(jnp.abs(out - ref)) / (jnp.max(jnp.abs(ref)) + 1e-6))
    assert rel_err < 5e-2, f"max relative error too large: {rel_err}"

    print("KERNEL_OK")
</pallas_src>

<mosaic_0001>
module attributes {stable_mosaic.version = 11 : i64} {
  func.func @_transform_kernel(%arg0: i32, %arg1: i32, %arg2: i32, %arg3: memref<256x128xbf16, #tpu.memory_space<vmem>>, %arg4: memref<128x128xbf16, #tpu.memory_space<vmem>>, %arg5: memref<256x1xf32, #tpu.memory_space<vmem>>, %arg6: memref<256x128xbf16, #tpu.memory_space<vmem>>, %arg7: memref<256x128xf32, #tpu.memory_space<vmem>>) attributes {dimension_semantics = [#tpu.dimension_semantics<parallel>, #tpu.dimension_semantics<parallel>, #tpu.dimension_semantics<arbitrary>], iteration_bounds = array<i64: 1, 1, 1>, scalar_prefetch = 0 : i64, scratch_operands = 1 : i64, tpu.core_type = #tpu.core_type<tc>, window_params = [{transform_indices = @transform_0, window_bounds = array<i64: 256, 128>}, {transform_indices = @transform_1, window_bounds = array<i64: 128, 128>}, {transform_indices = @transform_2, window_bounds = array<i64: 256, 1>}, {transform_indices = @transform_3, window_bounds = array<i64: 256, 128>}]} {
    %c0_i32 = arith.constant 0 : i32
    %0 = arith.cmpi eq, %arg2, %c0_i32 : i32
    %1 = arith.extui %0 : i1 to i32
    %c0_i32_0 = arith.constant 0 : i32
    %2 = arith.cmpi ne, %1, %c0_i32_0 : i32
    scf.if %2 {
      %cst_10 = arith.constant 0.000000e+00 : f32
      %12 = vector.broadcast %cst_10 : f32 to vector<256x128xf32>
      %c0_11 = arith.constant 0 : index
      %c0_12 = arith.constant 0 : index
      %13 = vector.load %arg7[%c0_11, %c0_12] : memref<256x128xf32, #tpu.memory_space<vmem>>, vector<256x128xf32>
      tpu.vector_store %arg7[%c0_11, %c0_12], %12 {strides = array<i32>} : memref<256x128xf32, #tpu.memory_space<vmem>>, vector<256x128xf32>,
    } else {
    }
    %c0 = arith.constant 0 : index
    %c0_1 = arith.constant 0 : index
    %3 = vector.load %arg7[%c0, %c0_1] : memref<256x128xf32, #tpu.memory_space<vmem>>, vector<256x128xf32>
    %c0_2 = arith.constant 0 : index
    %c0_3 = arith.constant 0 : index
    %4 = vector.load %arg3[%c0_2, %c0_3] : memref<256x128xbf16, #tpu.memory_space<vmem>>, vector<256x128xbf16>
    %c0_4 = arith.constant 0 : index
    %c0_5 = arith.constant 0 : index
    %5 = vector.load %arg4[%c0_4, %c0_5] : memref<128x128xbf16, #tpu.memory_space<vmem>>, vector<128x128xbf16>
    %cst = arith.constant dense<0.000000e+00> : vector<256x128xf32>
    %6 = tpu.matmul %4, %5, %cst {dimension_numbers = #tpu.dot_dimension_numbers<[1], [0], [0], [1], [0, 0, 1, 1], [], []>} : vector<256x128xbf16>, vector<128x128xbf16>, vector<256x128xf32> -> vector<256x128xf32>
    %7 = arith.addf %3, %6 : vector<256x128xf32>
    %c0_6 = arith.constant 0 : index
    %c0_7 = arith.constant 0 : index
    %8 = vector.load %arg7[%c0_6, %c0_7] : memref<256x128xf32, #tpu.memory_space<vmem>>, vector<256x128xf32>
    tpu.vector_store %arg7[%c0_6, %c0_7], %7 {strides = array<i32>} : memref<256x128xf32, #tpu.memory_space<vmem>>, vector<256x128xf32>,
    %c0_i32_8 = arith.constant 0 : i32
    %9 = arith.cmpi eq, %arg2, %c0_i32_8 : i32
    %10 = arith.extui %9 : i1 to i32
    %c0_i32_9 = arith.constant 0 : i32
    %11 = arith.cmpi ne, %10, %c0_i32_9 : i32
    scf.if %11 {
      %c0_10 = arith.constant 0 : index
      %c0_11 = arith.constant 0 : index
      %12 = vector.load %arg7[%c0_10, %c0_11] : memref<256x128xf32, #tpu.memory_space<vmem>>, vector<256x128xf32>
      %c0_12 = arith.constant 0 : index
      %c0_13 = arith.constant 0 : index
      %13 = vector.load %arg5[%c0_12, %c0_13] : memref<256x1xf32, #tpu.memory_space<vmem>>, vector<256x1xf32>
      %14 = vector.broadcast %13 : vector<256x1xf32> to vector<256x128xf32>
      %15 = arith.mulf %12, %14 : vector<256x128xf32>
      %16 = arith.truncf %15 : vector<256x128xf32> to vector<256x128xbf16>
      %c0_14 = arith.constant 0 : index
      %c0_15 = arith.constant 0 : index
      %17 = vector.load %arg6[%c0_14, %c0_15] : memref<256x128xbf16, #tpu.memory_space<vmem>>, vector<256x128xbf16>
      tpu.vector_store %arg6[%c0_14, %c0_15], %16 {strides = array<i32>} : memref<256x128xbf16, #tpu.memory_space<vmem>>, vector<256x128xbf16>,
    } else {
    }
    return
  }
  func.func @transform_0(%arg0: i32, %arg1: i32, %arg2: i32) -> (i32, i32) {
    %c0_i32 = arith.constant 0 : i32
    return %arg0, %arg2 : i32, i32
  }
  func.func @transform_1(%arg0: i32, %arg1: i32, %arg2: i32) -> (i32, i32) {
    %c0_i32 = arith.constant 0 : i32
    return %arg2, %arg1 : i32, i32
  }
  func.func @transform_2(%arg0: i32, %arg1: i32, %arg2: i32) -> (i32, i32) {
    %c0_i32 = arith.constant 0 : i32
    %c0_i32_0 = arith.constant 0 : i32
    return %arg0, %c0_i32 : i32, i32
  }
  func.func @transform_3(%arg0: i32, %arg1: i32, %arg2: i32) -> (i32, i32) {
    %c0_i32 = arith.constant 0 : i32
    return %arg0, %arg1 : i32, i32
  }
}

module attributes {stable_mosaic.version = 11 : i64} {
  func.func @_aggregate_kernel(%arg0: i32, %arg1: i32, %arg2: i32, %arg3: memref<256x256xbf16, #tpu.memory_space<vmem>>, %arg4: memref<256x128xbf16, #tpu.memory_space<vmem>>, %arg5: memref<256x1xf32, #tpu.memory_space<vmem>>, %arg6: memref<1x128xf32, #tpu.memory_space<vmem>>, %arg7: memref<256x128xbf16, #tpu.memory_space<vmem>>, %arg8: memref<256x128xf32, #tpu.memory_space<vmem>>) attributes {dimension_semantics = [#tpu.dimension_semantics<parallel>, #tpu.dimension_semantics<parallel>, #tpu.dimension_semantics<arbitrary>], iteration_bounds = array<i64: 1, 1, 1>, scalar_prefetch = 0 : i64, scratch_operands = 1 : i64, tpu.core_type = #tpu.core_type<tc>, window_params = [{transform_indices = @transform_0, window_bounds = array<i64: 256, 256>}, {transform_indices = @transform_1, window_bounds = array<i64: 256, 128>}, {transform_indices = @transform_2, window_bounds = array<i64: 256, 1>}, {transform_indices = @transform_3, window_bounds = array<i64: 1, 128>}, {transform_indices = @transform_4, window_bounds = array<i64: 256, 128>}]} {
    %c0_i32 = arith.constant 0 : i32
    %0 = arith.cmpi eq, %arg2, %c0_i32 : i32
    %1 = arith.extui %0 : i1 to i32
    %c0_i32_0 = arith.constant 0 : i32
    %2 = arith.cmpi ne, %1, %c0_i32_0 : i32
    scf.if %2 {
      %cst_10 = arith.constant 0.000000e+00 : f32
      %12 = vector.broadcast %cst_10 : f32 to vector<256x128xf32>
      %c0_11 = arith.constant 0 : index
      %c0_12 = arith.constant 0 : index
      %13 = vector.load %arg8[%c0_11, %c0_12] : memref<256x128xf32, #tpu.memory_space<vmem>>, vector<256x128xf32>
      tpu.vector_store %arg8[%c0_11, %c0_12], %12 {strides = array<i32>} : memref<256x128xf32, #tpu.memory_space<vmem>>, vector<256x128xf32>,
    } else {
    }
    %c0 = arith.constant 0 : index
    %c0_1 = arith.constant 0 : index
    %3 = vector.load %arg8[%c0, %c0_1] : memref<256x128xf32, #tpu.memory_space<vmem>>, vector<256x128xf32>
    %c0_2 = arith.constant 0 : index
    %c0_3 = arith.constant 0 : index
    %4 = vector.load %arg3[%c0_2, %c0_3] : memref<256x256xbf16, #tpu.memory_space<vmem>>, vector<256x256xbf16>
    %c0_4 = arith.constant 0 : index
    %c0_5 = arith.constant 0 : index
    %5 = vector.load %arg4[%c0_4, %c0_5] : memref<256x128xbf16, #tpu.memory_space<vmem>>, vector<256x128xbf16>
    %cst = arith.constant dense<0.000000e+00> : vector<256x128xf32>
    %6 = tpu.matmul %4, %5, %cst {dimension_numbers = #tpu.dot_dimension_numbers<[1], [0], [0], [1], [0, 0, 1, 1], [], []>} : vector<256x256xbf16>, vector<256x128xbf16>, vector<256x128xf32> -> vector<256x128xf32>
    %7 = arith.addf %3, %6 : vector<256x128xf32>
    %c0_6 = arith.constant 0 : index
    %c0_7 = arith.constant 0 : index
    %8 = vector.load %arg8[%c0_6, %c0_7] : memref<256x128xf32, #tpu.memory_space<vmem>>, vector<256x128xf32>
    tpu.vector_store %arg8[%c0_6, %c0_7], %7 {strides = array<i32>} : memref<256x128xf32, #tpu.memory_space<vmem>>, vector<256x128xf32>,
    %c0_i32_8 = arith.constant 0 : i32
    %9 = arith.cmpi eq, %arg2, %c0_i32_8 : i32
    %10 = arith.extui %9 : i1 to i32
    %c0_i32_9 = arith.constant 0 : i32
    %11 = arith.cmpi ne, %10, %c0_i32_9 : i32
    scf.if %11 {
      %c0_10 = arith.constant 0 : index
      %c0_11 = arith.constant 0 : index
      %12 = vector.load %arg8[%c0_10, %c0_11] : memref<256x128xf32, #tpu.memory_space<vmem>>, vector<256x128xf32>
      %c0_12 = arith.constant 0 : index
      %c0_13 = arith.constant 0 : index
      %13 = vector.load %arg5[%c0_12, %c0_13] : memref<256x1xf32, #tpu.memory_space<vmem>>, vector<256x1xf32>
      %14 = vector.broadcast %13 : vector<256x1xf32> to vector<256x128xf32>
      %15 = arith.mulf %12, %14 : vector<256x128xf32>
      %c0_14 = arith.constant 0 : index
      %c0_15 = arith.constant 0 : index
      %16 = vector.load %arg6[%c0_14, %c0_15] : memref<1x128xf32, #tpu.memory_space<vmem>>, vector<1x128xf32>
      %17 = vector.broadcast %16 : vector<1x128xf32> to vector<256x128xf32>
      %18 = arith.addf %15, %17 : vector<256x128xf32>
      %cst_16 = arith.constant 0.000000e+00 : f32
      %19 = vector.broadcast %cst_16 : f32 to vector<256x128xf32>
      %20 = arith.maximumf %18, %19 : vector<256x128xf32>
      %21 = arith.truncf %20 : vector<256x128xf32> to vector<256x128xbf16>
      %c0_17 = arith.constant 0 : index
      %c0_18 = arith.constant 0 : index
      %22 = vector.load %arg7[%c0_17, %c0_18] : memref<256x128xbf16, #tpu.memory_space<vmem>>, vector<256x128xbf16>
      tpu.vector_store %arg7[%c0_17, %c0_18], %21 {strides = array<i32>} : memref<256x128xbf16, #tpu.memory_space<vmem>>, vector<256x128xbf16>,
    } else {
    }
    return
  }
  func.func @transform_0(%arg0: i32, %arg1: i32, %arg2: i32) -> (i32, i32) {
    %c0_i32 = arith.constant 0 : i32
    return %arg0, %arg2 : i32, i32
  }
  func.func @transform_1(%arg0: i32, %arg1: i32, %arg2: i32) -> (i32, i32) {
    %c0_i32 = arith.constant 0 : i32
    return %arg2, %arg1 : i32, i32
  }
  func.func @transform_2(%arg0: i32, %arg1: i32, %arg2: i32) -> (i32, i32) {
    %c0_i32 = arith.constant 0 : i32
    %c0_i32_0 = arith.constant 0 : i32
    return %arg0, %c0_i32 : i32, i32
  }
  func.func @transform_3(%arg0: i32, %arg1: i32, %arg2: i32) -> (i32, i32) {
    %c0_i32 = arith.constant 0 : i32
    %c0_i32_0 = arith.constant 0 : i32
    return %c0_i32, %arg1 : i32, i32
  }
  func.func @transform_4(%arg0: i32, %arg1: i32, %arg2: i32) -> (i32, i32) {
    %c0_i32 = arith.constant 0 : i32
    return %arg0, %arg1 : i32, i32
  }
}

</mosaic_0001>

<llo_original>
// kernel: gcn_for_emb_forward.4
$region0: #{gcn_for_emb_forward.4}
  #allocation0 [shape = 'u32[]', space=smem, size = 0x4, offset = 0x4, fixed_abs, tag = 'smem constant byte address 0x4 - core index']
  #allocation1 [shape = 'u32[144,128]{1,0:T(1,128)}', space=vmem, size = 0x12000, scoped, tag = 'internal scratch']
  #allocation2 [shape = 'f32[256,128]{1,0:T(8,128)}', space=vmem, size = 0x20000, scoped, tag = 'scratch operand']
  %s0 = inlined_call_operand.vmem [shape: bf16[256,128], index: 0, kind: input, shape index: {}]
  %s1 = inlined_call_operand.vmem [shape: bf16[128,128], index: 1, kind: input, shape index: {}]
  %s2 = inlined_call_operand.vmem [shape: f32[256,1], index: 2, kind: input, shape index: {}]
  %s3 = inlined_call_operand.vmem [shape: bf16[256,128], index: 3, kind: output, shape index: {}]
  %s4 = sld [smem:[#allocation0]]
  $region30: #{gcn_for_emb_forward.4} parent=0
    _
  %s6 = ssub.s32 1, %s4
  %s7 = scalar_select 0, %s6, %s4
  // Predicated region
  $region2: #{gcn_for_emb_forward.4} parent=0 // pred_check
    _
  $region3: #{gcn_for_emb_forward.4} parent=0 // pred_check_branch
    %9 = sbr.rel (0) target = $region5
  $region4: #{gcn_for_emb_forward.4} parent=0 // pred_region
    _
  $region5: #{gcn_for_emb_forward.4} parent=0 // pred_fallthru
    _
  // Predicated region
  $region6: #{gcn_for_emb_forward.4} parent=0 // pred_check
    _
  $region7: #{gcn_for_emb_forward.4} parent=0 // pred_check_branch
    %11 = sbr.rel (0) target = $region9
  $region8: #{gcn_for_emb_forward.4} parent=0 // pred_region
    _
  $region9: #{gcn_for_emb_forward.4} parent=0 // pred_fallthru
    _
  // Predicated region
  $region10: #{gcn_for_emb_forward.4} parent=0 // pred_check
    _
  $region11: #{gcn_for_emb_forward.4} parent=0 // pred_check_branch
    %13 = sbr.rel (0) target = $region13
  $region12: #{gcn_for_emb_forward.4} parent=0 // pred_region
    _
  $region13: #{gcn_for_emb_forward.4} parent=0 // pred_fallthru
    _
  %p15 = scmp.eq.s32.totalorder 0, 0
  // Predicated region
  $region14: #{gcn_for_emb_forward.4} parent=0 // pred_check
    %p16 = pneg %p15
  $region15: #{gcn_for_emb_forward.4} parent=0 // pred_check_branch
    %18 = sbr.rel (%p16) target = $region17
  $region16: #{gcn_for_emb_forward.4} parent=0 // pred_region
    %19 = vst [vmem:[#allocation2] sm:$0xff] 0.0
    %20 = vst [vmem:[#allocation2 + $0x8] sm:$0xff] 0.0
    %21 = vst [vmem:[#allocation2 + $0x10] sm:$0xff] 0.0
    %22 = vst [vmem:[#allocation2 + $0x18] sm:$0xff] 0.0
    %23 = vst [vmem:[#allocation2 + $0x20] sm:$0xff] 0.0
    %24 = vst [vmem:[#allocation2 + $0x28] sm:$0xff] 0.0
    %25 = vst [vmem:[#allocation2 + $0x30] sm:$0xff] 0.0
    %26 = vst [vmem:[#allocation2 + $0x38] sm:$0xff] 0.0
    %27 = vst [vmem:[#allocation2 + $0x40] sm:$0xff] 0.0
    %28 = vst [vmem:[#allocation2 + $0x48] sm:$0xff] 0.0
    %29 = vst [vmem:[#allocation2 + $0x50] sm:$0xff] 0.0
    %30 = vst [vmem:[#allocation2 + $0x58] sm:$0xff] 0.0
    %31 = vst [vmem:[#allocation2 + $0x60] sm:$0xff] 0.0
    %32 = vst [vmem:[#allocation2 + $0x68] sm:$0xff] 0.0
    %33 = vst [vmem:[#allocation2 + $0x70] sm:$0xff] 0.0
    %34 = vst [vmem:[#allocation2 + $0x78] sm:$0xff] 0.0
    %35 = vst [vmem:[#allocation2 + $0x80] sm:$0xff] 0.0
    %36 = vst [vmem:[#allocation2 + $0x88] sm:$0xff] 0.0
    %37 = vst [vmem:[#allocation2 + $0x90] sm:$0xff] 0.0
    %38 = vst [vmem:[#allocation2 + $0x98] sm:$0xff] 0.0
    %39 = vst [vmem:[#allocation2 + $0xa0] sm:$0xff] 0.0
    %40 = vst [vmem:[#allocation2 + $0xa8] sm:$0xff] 0.0
    %41 = vst [vmem:[#allocation2 + $0xb0] sm:$0xff] 0.0
    %42 = vst [vmem:[#allocation2 + $0xb8] sm:$0xff] 0.0
    %43 = vst [vmem:[#allocation2 + $0xc0] sm:$0xff] 0.0
    %44 = vst [vmem:[#allocation2 + $0xc8] sm:$0xff] 0.0
    %45 = vst [vmem:[#allocation2 + $0xd0] sm:$0xff] 0.0
    %46 = vst [vmem:[#allocation2 + $0xd8] sm:$0xff] 0.0
    %47 = vst [vmem:[#allocation2 + $0xe0] sm:$0xff] 0.0
    %48 = vst [vmem:[#allocation2 + $0xe8] sm:$0xff] 0.0
    %49 = vst [vmem:[#allocation2 + $0xf0] sm:$0xff] 0.0
    %50 = vst [vmem:[#allocation2 + $0xf8] sm:$0xff] 0.0
  $region17: #{gcn_for_emb_forward.4} parent=0 // pred_fallthru
    _
  %v51 = vld [vmem:[#allocation2] sm:$0xff]
  %v52 = vld [vmem:[#allocation2 + $0x8] sm:$0xff]
  %v53 = vld [vmem:[#allocation2 + $0x10] sm:$0xff]
  %v54 = vld [vmem:[#allocation2 + $0x18] sm:$0xff]
  %v55 = vld [vmem:[#allocation2 + $0x20] sm:$0xff]
  %v56 = vld [vmem:[#allocation2 + $0x28] sm:$0xff]
  %v57 = vld [vmem:[#allocation2 + $0x30] sm:$0xff]
  %v58 = vld [vmem:[#allocation2 + $0x38] sm:$0xff]
  %v59 = vld [vmem:[#allocation2 + $0x40] sm:$0xff]
  %v60 = vld [vmem:[#allocation2 + $0x48] sm:$0xff]
  %v61 = vld [vmem:[#allocation2 + $0x50] sm:$0xff]
  %v62 = vld [vmem:[#allocation2 + $0x58] sm:$0xff]
  %v63 = vld [vmem:[#allocation2 + $0x60] sm:$0xff]
  %v64 = vld [vmem:[#allocation2 + $0x68] sm:$0xff]
  %v65 = vld [vmem:[#allocation2 + $0x70] sm:$0xff]
  %v66 = vld [vmem:[#allocation2 + $0x78] sm:$0xff]
  %v67 = vld [vmem:[#allocation2 + $0x80] sm:$0xff]
  %v68 = vld [vmem:[#allocation2 + $0x88] sm:$0xff]
  %v69 = vld [vmem:[#allocation2 + $0x90] sm:$0xff]
  %v70 = vld [vmem:[#allocation2 + $0x98] sm:$0xff]
  %v71 = vld [vmem:[#allocation2 + $0xa0] sm:$0xff]
  %v72 = vld [vmem:[#allocation2 + $0xa8] sm:$0xff]
  %v73 = vld [vmem:[#allocation2 + $0xb0] sm:$0xff]
  %v74 = vld [vmem:[#allocation2 + $0xb8] sm:$0xff]
  %v75 = vld [vmem:[#allocation2 + $0xc0] sm:$0xff]
  %v76 = vld [vmem:[#allocation2 + $0xc8] sm:$0xff]
  %v77 = vld [vmem:[#allocation2 + $0xd0] sm:$0xff]
  %v78 = vld [vmem:[#allocation2 + $0xd8] sm:$0xff]
  %v79 = vld [vmem:[#allocation2 + $0xe0] sm:$0xff]
  %v80 = vld [vmem:[#allocation2 + $0xe8] sm:$0xff]
  %v81 = vld [vmem:[#allocation2 + $0xf0] sm:$0xff]
  %v82 = vld [vmem:[#allocation2 + $0xf8] sm:$0xff]
  %v83 = vld [vmem:[%s0] sm:$0xf]
  %v84 = vld [vmem:[%s0 + $0x4] sm:$0xf]
  %v85 = vld [vmem:[%s0 + $0x8] sm:$0xf]
  %v86 = vld [vmem:[%s0 + $0xc] sm:$0xf]
  %v87 = vld [vmem:[%s0 + $0x10] sm:$0xf]
  %v88 = vld [vmem:[%s0 + $0x14] sm:$0xf]
  %v89 = vld [vmem:[%s0 + $0x18] sm:$0xf]
  %v90 = vld [vmem:[%s0 + $0x1c] sm:$0xf]
  %v91 = vld [vmem:[%s0 + $0x20] sm:$0xf]
  %v92 = vld [vmem:[%s0 + $0x24] sm:$0xf]
  %v93 = vld [vmem:[%s0 + $0x28] sm:$0xf]
  %v94 = vld [vmem:[%s0 + $0x2c] sm:$0xf]
  %v95 = vld [vmem:[%s0 + $0x30] sm:$0xf]
  %v96 = vld [vmem:[%s0 + $0x34] sm:$0xf]
  %v97 = vld [vmem:[%s0 + $0x38] sm:$0xf]
  %v98 = vld [vmem:[%s0 + $0x3c] sm:$0xf]
  %v99 = vld [vmem:[%s0 + $0x40] sm:$0xf]
  %v100 = vld [vmem:[%s0 + $0x44] sm:$0xf]
  %v101 = vld [vmem:[%s0 + $0x48] sm:$0xf]
  %v102 = vld [vmem:[%s0 + $0x4c] sm:$0xf]
  %v103 = vld [vmem:[%s0 + $0x50] sm:$0xf]
  %v104 = vld [vmem:[%s0 + $0x54] sm:$0xf]
  %v105 = vld [vmem:[%s0 + $0x58] sm:$0xf]
  %v106 = vld [vmem:[%s0 + $0x5c] sm:$0xf]
  %v107 = vld [vmem:[%s0 + $0x60] sm:$0xf]
  %v108 = vld [vmem:[%s0 + $0x64] sm:$0xf]
  %v109 = vld [vmem:[%s0 + $0x68] sm:$0xf]
  %v110 = vld [vmem:[%s0 + $0x6c] sm:$0xf]
  %v111 = vld [vmem:[%s0 + $0x70] sm:$0xf]
  %v112 = vld [vmem:[%s0 + $0x74] sm:$0xf]
  %v113 = vld [vmem:[%s0 + $0x78] sm:$0xf]
  %v114 = vld [vmem:[%s0 + $0x7c] sm:$0xf]
  %v115 = vld [vmem:[%s1] sm:$0xf]
  %v116 = vld [vmem:[%s1 + $0x4] sm:$0xf]
  %v117 = vld [vmem:[%s1 + $0x8] sm:$0xf]
  %v118 = vld [vmem:[%s1 + $0xc] sm:$0xf]
  %v119 = vld [vmem:[%s1 + $0x10] sm:$0xf]
  %v120 = vld [vmem:[%s1 + $0x14] sm:$0xf]
  %v121 = vld [vmem:[%s1 + $0x18] sm:$0xf]
  %v122 = vld [vmem:[%s1 + $0x1c] sm:$0xf]
  %v123 = vld [vmem:[%s1 + $0x20] sm:$0xf]
  %v124 = vld [vmem:[%s1 + $0x24] sm:$0xf]
  %v125 = vld [vmem:[%s1 + $0x28] sm:$0xf]
  %v126 = vld [vmem:[%s1 + $0x2c] sm:$0xf]
  %v127 = vld [vmem:[%s1 + $0x30] sm:$0xf]
  %v128 = vld [vmem:[%s1 + $0x34] sm:$0xf]
  %v129 = vld [vmem:[%s1 + $0x38] sm:$0xf]
  %v130 = vld [vmem:[%s1 + $0x3c] sm:$0xf]
  %v163 = vunpack.c.l.b16 %v83
  %v164 = vunpack.c.l.b16 %v84
  %v165 = vunpack.c.l.b16 %v85
  %v166 = vunpack.c.l.b16 %v86
  %v167 = vunpack.c.l.b16 %v87
  %v168 = vunpack.c.l.b16 %v88
  %v169 = vunpack.c.l.b16 %v89
  %v170 = vunpack.c.l.b16 %v90
  %v171 = vunpack.c.l.b16 %v91
  %v172 = vunpack.c.l.b16 %v92
  %v173 = vunpack.c.l.b16 %v93
  %v174 = vunpack.c.l.b16 %v94
  %v175 = vunpack.c.l.b16 %v95
  %v176 = vunpack.c.l.b16 %v96
  %v177 = vunpack.c.l.b16 %v97
  %v178 = vunpack.c.l.b16 %v98
  %v179 = vunpack.c.l.b16 %v99
  %v180 = vunpack.c.l.b16 %v100
  %v181 = vunpack.c.l.b16 %v101
  %v182 = vunpack.c.l.b16 %v102
  %v183 = vunpack.c.l.b16 %v103
  %v184 = vunpack.c.l.b16 %v104
  %v185 = vunpack.c.l.b16 %v105
  %v186 = vunpack.c.l.b16 %v106
  %v187 = vunpack.c.l.b16 %v107
  %v188 = vunpack.c.l.b16 %v108
  %v189 = vunpack.c.l.b16 %v109
  %v190 = vunpack.c.l.b16 %v110
  %v191 = vunpack.c.l.b16 %v111
  %v192 = vunpack.c.l.b16 %v112
  %v193 = vunpack.c.l.b16 %v113
  %v194 = vunpack.c.l.b16 %v114
  %v195 = vpack.c.b16 %v164, %v163
  %v196 = vpack.c.b16 %v166, %v165
  %v197 = vpack.c.b16 %v168, %v167
  %v198 = vpack.c.b16 %v170, %v169
  %v199 = vpack.c.b16 %v172, %v171
  %v200 = vpack.c.b16 %v174, %v173
  %v201 = vpack.c.b16 %v176, %v175
  %v202 = vpack.c.b16 %v178, %v177
  %v203 = vpack.c.b16 %v180, %v179
  %v204 = vpack.c.b16 %v182, %v181
  %v205 = vpack.c.b16 %v184, %v183
  %v206 = vpack.c.b16 %v186, %v185
  %v207 = vpack.c.b16 %v188, %v187
  %v208 = vpack.c.b16 %v190, %v189
  %v209 = vpack.c.b16 %v192, %v191
  %v210 = vpack.c.b16 %v194, %v193
  %v243 = vunpack.c.l.b16 %v115
  %v244 = vunpack.c.l.b16 %v116
  %v245 = vunpack.c.l.b16 %v117
  %v246 = vunpack.c.l.b16 %v118
  %v247 = vunpack.c.l.b16 %v119
  %v248 = vunpack.c.l.b16 %v120
  %v249 = vunpack.c.l.b16 %v121
  %v250 = vunpack.c.l.b16 %v122
  %v251 = vunpack.c.l.b16 %v123
  %v252 = vunpack.c.l.b16 %v124
  %v253 = vunpack.c.l.b16 %v125
  %v254 = vunpack.c.l.b16 %v126
  %v255 = vunpack.c.l.b16 %v127
  %v256 = vunpack.c.l.b16 %v128
  %v257 = vunpack.c.l.b16 %v129
  %v258 = vunpack.c.l.b16 %v130
  %v259 = vpack.c.b16 %v244, %v243
  %v260 = vpack.c.b16 %v246, %v245
  %v261 = vpack.c.b16 %v248, %v247
  %v262 = vpack.c.b16 %v250, %v249
  %v263 = vpack.c.b16 %v252, %v251
  %v264 = vpack.c.b16 %v254, %v253
  %v265 = vpack.c.b16 %v256, %v255
  %v266 = vpack.c.b16 %v258, %v257
  %275 = vmatprep.subr.bf16.mxu0 0
  %276 = vmatpush1.bf16.msra.mxu0 %v259
  %277 = vmatprep.subr.bf16.mxu0 0
  %278 = vmatpush1.bf16.msra.mxu0 %v260
  %279 = vmatprep.subr.bf16.mxu0 0
  %280 = vmatpush1.bf16.msra.mxu0 %v261
  %281 = vmatprep.subr.bf16.mxu0 0
  %282 = vmatpush1.bf16.msra.mxu0 %v262
  %283 = vmatprep.subr.bf16.mxu0 0
  %284 = vmatpush1.bf16.msra.mxu0 %v263
  %285 = vmatprep.subr.bf16.mxu0 0
  %286 = vmatpush1.bf16.msra.mxu0 %v264
  %287 = vmatprep.subr.bf16.mxu0 0
  %288 = vmatpush1.bf16.msra.mxu0 %v265
  %289 = vmatprep.subr.bf16.mxu0 0
  %290 = vmatpush1.bf16.msra.mxu0 %v266
  %291 = vmatprep.subr.bf16.mxu0 0
  %292 = vmatpush1.bf16.msra.mxu0 0
  %293 = vmatprep.subr.bf16.mxu0 0
  %294 = vmatpush1.bf16.msra.mxu0 0
  %295 = vmatprep.subr.bf16.mxu0 0
  %296 = vmatpush1.bf16.msra.mxu0 0
  %297 = vmatprep.subr.bf16.mxu0 0
  %298 = vmatpush1.bf16.msra.mxu0 0
  %299 = vmatprep.subr.bf16.mxu0 0
  %300 = vmatpush1.bf16.msra.mxu0 0
  %301 = vmatprep.subr.bf16.mxu0 0
  %302 = vmatpush1.bf16.msra.mxu0 0
  %303 = vmatprep.subr.bf16.mxu0 0
  %304 = vmatpush1.bf16.msra.mxu0 0
  %305 = vmatprep.subr.bf16.mxu0 0
  %306 = vmatpush1.bf16.msra.mxu0 0
  %307 = vmatprep.mubr.bf16.mxu0 0
  %308 = vmatmul.mubr.bf16.gmra.mrb[0].mxu0 %v195
  %v309 = vpop.f32.mrb[0].mxu0
  %v310 = vadd.f32 0.0, %v309
  %v311 = vpop.f32.mrb[0].mxu0
  %v312 = vpop.f32.mrb[0].mxu0
  %v313 = vadd.f32 0.0, %v312
  %v314 = vpop.f32.mrb[0].mxu0
  %315 = vmatprep.mubr.bf16.mxu0 0
  %316 = vmatmul.mubr.bf16.gmra.mrb[0].mxu0 %v196
  %v317 = vpop.f32.mrb[0].mxu0
  %v318 = vadd.f32 0.0, %v317
  %v319 = vpop.f32.mrb[0].mxu0
  %v320 = vpop.f32.mrb[0].mxu0
  %v321 = vadd.f32 0.0, %v320
  %v322 = vpop.f32.mrb[0].mxu0
  %323 = vmatprep.mubr.bf16.mxu0 0
  %324 = vmatmul.mubr.bf16.gmra.mrb[0].mxu0 %v197
  %v325 = vpop.f32.mrb[0].mxu0
  %v326 = vadd.f32 0.0, %v325
  %v327 = vpop.f32.mrb[0].mxu0
  %v328 = vpop.f32.mrb[0].mxu0
  %v329 = vadd.f32 0.0, %v328
  %v330 = vpop.f32.mrb[0].mxu0
  %331 = vmatprep.mubr.bf16.mxu0 0
  %332 = vmatmul.mubr.bf16.gmra.mrb[0].mxu0 %v198
  %v333 = vpop.f32.mrb[0].mxu0
  %v334 = vadd.f32 0.0, %v333
  %v335 = vpop.f32.mrb[0].mxu0
  %v336 = vpop.f32.mrb[0].mxu0
  %v337 = vadd.f32 0.0, %v336
  %v338 = vpop.f32.mrb[0].mxu0
  %339 = vmatprep.mubr.bf16.mxu0 0
  %340 = vmatmul.mubr.bf16.gmra.mrb[0].mxu0 %v199
  %v341 = vpop.f32.mrb[0].mxu0
  %v342 = vadd.f32 0.0, %v341
  %v343 = vpop.f32.mrb[0].mxu0
  %v344 = vpop.f32.mrb[0].mxu0
  %v345 = vadd.f32 0.0, %v344
  %v346 = vpop.f32.mrb[0].mxu0
  %347 = vmatprep.mubr.bf16.mxu0 0
  %348 = vmatmul.mubr.bf16.gmra.mrb[0].mxu0 %v200
  %v349 = vpop.f32.mrb[0].mxu0
  %v350 = vadd.f32 0.0, %v349
  %v351 = vpop.f32.mrb[0].mxu0
  %v352 = vpop.f32.mrb[0].mxu0
  %v353 = vadd.f32 0.0, %v352
  %v354 = vpop.f32.mrb[0].mxu0
  %355 = vmatprep.mubr.bf16.mxu0 0
  %356 = vmatmul.mubr.bf16.gmra.mrb[0].mxu0 %v201
  %v357 = vpop.f32.mrb[0].mxu0
  %v358 = vadd.f32 0.0, %v357
  %v359 = vpop.f32.mrb[0].mxu0
  %v360 = vpop.f32.mrb[0].mxu0
  %v361 = vadd.f32 0.0, %v360
  %v362 = vpop.f32.mrb[0].mxu0
  %363 = vmatprep.mubr.bf16.mxu0 0
  %364 = vmatmul.mubr.bf16.gmra.mrb[0].mxu0 %v202
  %v365 = vpop.f32.mrb[0].mxu0
  %v366 = vadd.f32 0.0, %v365
  %v367 = vpop.f32.mrb[0].mxu0
  %v368 = vpop.f32.mrb[0].mxu0
  %v369 = vadd.f32 0.0, %v368
  %v370 = vpop.f32.mrb[0].mxu0
  %371 = vmatprep.mubr.bf16.mxu0 0
  %372 = vmatmul.mubr.bf16.gmra.mrb[0].mxu0 %v203
  %v373 = vpop.f32.mrb[0].mxu0
  %v374 = vadd.f32 0.0, %v373
  %v375 = vpop.f32.mrb[0].mxu0
  %v376 = vpop.f32.mrb[0].mxu0
  %v377 = vadd.f32 0.0, %v376
  %v378 = vpop.f32.mrb[0].mxu0
  %379 = vmatprep.mubr.bf16.mxu0 0
  %380 = vmatmul.mubr.bf16.gmra.mrb[0].mxu0 %v204
  %v381 = vpop.f32.mrb[0].mxu0
  %v382 = vadd.f32 0.0, %v381
  %v383 = vpop.f32.mrb[0].mxu0
  %v384 = vpop.f32.mrb[0].mxu0
  %v385 = vadd.f32 0.0, %v384
  %v386 = vpop.f32.mrb[0].mxu0
  %387 = vmatprep.mubr.bf16.mxu0 0
  %388 = vmatmul.mubr.bf16.gmra.mrb[0].mxu0 %v205
  %v389 = vpop.f32.mrb[0].mxu0
  %v390 = vadd.f32 0.0, %v389
  %v391 = vpop.f32.mrb[0].mxu0
  %v392 = vpop.f32.mrb[0].mxu0
  %v393 = vadd.f32 0.0, %v392
  %v394 = vpop.f32.mrb[0].mxu0
  %395 = vmatprep.mubr.bf16.mxu0 0
  %396 = vmatmul.mubr.bf16.gmra.mrb[0].mxu0 %v206
  %v397 = vpop.f32.mrb[0].mxu0
  %v398 = vadd.f32 0.0, %v397
  %v399 = vpop.f32.mrb[0].mxu0
  %v400 = vpop.f32.mrb[0].mxu0
  %v401 = vadd.f32 0.0, %v400
  %v402 = vpop.f32.mrb[0].mxu0
  %403 = vmatprep.mubr.bf16.mxu0 0
  %404 = vmatmul.mubr.bf16.gmra.mrb[0].mxu0 %v207
  %v405 = vpop.f32.mrb[0].mxu0
  %v406 = vadd.f32 0.0, %v405
  %v407 = vpop.f32.mrb[0].mxu0
  %v408 = vpop.f32.mrb[0].mxu0
  %v409 = vadd.f32 0.0, %v408
  %v410 = vpop.f32.mrb[0].mxu0
  %411 = vmatprep.mubr.bf16.mxu0 0
  %412 = vmatmul.mubr.bf16.gmra.mrb[0].mxu0 %v208
  %v413 = vpop.f32.mrb[0].mxu0
  %v414 = vadd.f32 0.0, %v413
  %v415 = vpop.f32.mrb[0].mxu0
  %v416 = vpop.f32.mrb[0].mxu0
  %v417 = vadd.f32 0.0, %v416
  %v418 = vpop.f32.mrb[0].mxu0
  %419 = vmatprep.mubr.bf16.mxu0 0
  %420 = vmatmul.mubr.bf16.gmra.mrb[0].mxu0 %v209
  %v421 = vpop.f32.mrb[0].mxu0
  %v422 = vadd.f32 0.0, %v421
  %v423 = vpop.f32.mrb[0].mxu0
  %v424 = vpop.f32.mrb[0].mxu0
  %v425 = vadd.f32 0.0, %v424
  %v426 = vpop.f32.mrb[0].mxu0
  %427 = vmatprep.mubr.bf16.mxu0 0
  %428 = vmatmul.mubr.bf16.gmra.mrb[0].mxu0 %v210
  %v429 = vpop.f32.mrb[0].mxu0
  %v430 = vadd.f32 0.0, %v429
  %v431 = vpop.f32.mrb[0].mxu0
  %v432 = vpop.f32.mrb[0].mxu0
  %v433 = vadd.f32 0.0, %v432
  %v434 = vpop.f32.mrb[0].mxu0
  %435 = vdwg.mxu0
  %v436 = vadd.f32 %v51, %v310
  %v437 = vadd.f32 %v52, %v313
  %v438 = vadd.f32 %v53, %v318
  %v439 = vadd.f32 %v54, %v321
  %v440 = vadd.f32 %v55, %v326
  %v441 = vadd.f32 %v56, %v329
  %v442 = vadd.f32 %v57, %v334
  %v443 = vadd.f32 %v58, %v337
  %v444 = vadd.f32 %v59, %v342
  %v445 = vadd.f32 %v60, %v345
  %v446 = vadd.f32 %v61, %v350
  %v447 = vadd.f32 %v62, %v353
  %v448 = vadd.f32 %v63, %v358
  %v449 = vadd.f32 %v64, %v361
  %v450 = vadd.f32 %v65, %v366
  %v451 = vadd.f32 %v66, %v369
  %v452 = vadd.f32 %v67, %v374
  %v453 = vadd.f32 %v68, %v377
  %v454 = vadd.f32 %v69, %v382
  %v455 = vadd.f32 %v70, %v385
  %v456 = vadd.f32 %v71, %v390
  %v457 = vadd.f32 %v72, %v393
  %v458 = vadd.f32 %v73, %v398
  %v459 = vadd.f32 %v74, %v401
  %v460 = vadd.f32 %v75, %v406
  %v461 = vadd.f32 %v76, %v409
  %v462 = vadd.f32 %v77, %v414
  %v463 = vadd.f32 %v78, %v417
  %v464 = vadd.f32 %v79, %v422
  %v465 = vadd.f32 %v80, %v425
  %v466 = vadd.f32 %v81, %v430
  %v467 = vadd.f32 %v82, %v433
  %468 = vst [vmem:[#allocation2] sm:$0xff] %v436
  %469 = vst [vmem:[#allocation2 + $0x8] sm:$0xff] %v437
  %470 = vst [vmem:[#allocation2 + $0x10] sm:$0xff] %v438
  %471 = vst [vmem:[#allocation2 + $0x18] sm:$0xff] %v439
  %472 = vst [vmem:[#allocation2 + $0x20] sm:$0xff] %v440
  %473 = vst [vmem:[#allocation2 + $0x28] sm:$0xff] %v441
  %474 = vst [vmem:[#allocation2 + $0x30] sm:$0xff] %v442
  %475 = vst [vmem:[#allocation2 + $0x38] sm:$0xff] %v443
  %476 = vst [vmem:[#allocation2 + $0x40] sm:$0xff] %v444
  %477 = vst [vmem:[#allocation2 + $0x48] sm:$0xff] %v445
  %478 = vst [vmem:[#allocation2 + $0x50] sm:$0xff] %v446
  %479 = vst [vmem:[#allocation2 + $0x58] sm:$0xff] %v447
  %480 = vst [vmem:[#allocation2 + $0x60] sm:$0xff] %v448
  %481 = vst [vmem:[#allocation2 + $0x68] sm:$0xff] %v449
  %482 = vst [vmem:[#allocation2 + $0x70] sm:$0xff] %v450
  %483 = vst [vmem:[#allocation2 + $0x78] sm:$0xff] %v451
  %484 = vst [vmem:[#allocation2 + $0x80] sm:$0xff] %v452
  %485 = vst [vmem:[#allocation2 + $0x88] sm:$0xff] %v453
  %486 = vst [vmem:[#allocation2 + $0x90] sm:$0xff] %v454
  %487 = vst [vmem:[#allocation2 + $0x98] sm:$0xff] %v455
  %488 = vst [vmem:[#allocation2 + $0xa0] sm:$0xff] %v456
  %489 = vst [vmem:[#allocation2 + $0xa8] sm:$0xff] %v457
  %490 = vst [vmem:[#allocation2 + $0xb0] sm:$0xff] %v458
  %491 = vst [vmem:[#allocation2 + $0xb8] sm:$0xff] %v459
  %492 = vst [vmem:[#allocation2 + $0xc0] sm:$0xff] %v460
  %493 = vst [vmem:[#allocation2 + $0xc8] sm:$0xff] %v461
  %494 = vst [vmem:[#allocation2 + $0xd0] sm:$0xff] %v462
  %495 = vst [vmem:[#allocation2 + $0xd8] sm:$0xff] %v463
  %496 = vst [vmem:[#allocation2 + $0xe0] sm:$0xff] %v464
  %497 = vst [vmem:[#allocation2 + $0xe8] sm:$0xff] %v465
  %498 = vst [vmem:[#allocation2 + $0xf0] sm:$0xff] %v466
  %499 = vst [vmem:[#allocation2 + $0xf8] sm:$0xff] %v467
  // Predicated region
  $region18: #{gcn_for_emb_forward.4} parent=0 // pred_check
    %p500 = pneg %p15
  $region19: #{gcn_for_emb_forward.4} parent=0 // pred_check_branch
    %502 = sbr.rel (%p500) target = $region21
  $region20: #{gcn_for_emb_forward.4} parent=0 // pred_region
    %v503 = vld [vmem:[#allocation2] sm:$0xff]
    %v504 = vld [vmem:[#allocation2 + $0x8] sm:$0xff]
    %v505 = vld [vmem:[#allocation2 + $0x10] sm:$0xff]
    %v506 = vld [vmem:[#allocation2 + $0x18] sm:$0xff]
    %v507 = vld [vmem:[#allocation2 + $0x20] sm:$0xff]
    %v508 = vld [vmem:[#allocation2 + $0x28] sm:$0xff]
    %v509 = vld [vmem:[#allocation2 + $0x30] sm:$0xff]
    %v510 = vld [vmem:[#allocation2 + $0x38] sm:$0xff]
    %v511 = vld [vmem:[#allocation2 + $0x40] sm:$0xff]
    %v512 = vld [vmem:[#allocation2 + $0x48] sm:$0xff]
    %v513 = vld [vmem:[#allocation2 + $0x50] sm:$0xff]
    %v514 = vld [vmem:[#allocation2 + $0x58] sm:$0xff]
    %v515 = vld [vmem:[#allocation2 + $0x60] sm:$0xff]
    %v516 = vld [vmem:[#allocation2 + $0x68] sm:$0xff]
    %v517 = vld [vmem:[#allocation2 + $0x70] sm:$0xff]
    %v518 = vld [vmem:[#allocation2 + $0x78] sm:$0xff]
    %v519 = vld [vmem:[#allocation2 + $0x80] sm:$0xff]
    %v520 = vld [vmem:[#allocation2 + $0x88] sm:$0xff]
    %v521 = vld [vmem:[#allocation2 + $0x90] sm:$0xff]
    %v522 = vld [vmem:[#allocation2 + $0x98] sm:$0xff]
    %v523 = vld [vmem:[#allocation2 + $0xa0] sm:$0xff]
    %v524 = vld [vmem:[#allocation2 + $0xa8] sm:$0xff]
    %v525 = vld [vmem:[#allocation2 + $0xb0] sm:$0xff]
    %v526 = vld [vmem:[#allocation2 + $0xb8] sm:$0xff]
    %v527 = vld [vmem:[#allocation2 + $0xc0] sm:$0xff]
    %v528 = vld [vmem:[#allocation2 + $0xc8] sm:$0xff]
    %v529 = vld [vmem:[#allocation2 + $0xd0] sm:$0xff]
    %v530 = vld [vmem:[#allocation2 + $0xd8] sm:$0xff]
    %v531 = vld [vmem:[#allocation2 + $0xe0] sm:$0xff]
    %v532 = vld [vmem:[#allocation2 + $0xe8] sm:$0xff]
    %v533 = vld [vmem:[#allocation2 + $0xf0] sm:$0xff]
    %v534 = vld [vmem:[#allocation2 + $0xf8] sm:$0xff]
    %v535 = vld [vmem:[%s2] sm:$0xff]
    %v536 = vld [vmem:[%s2 + $0x8] sm:$0xff]
    %v537 = vld [vmem:[%s2 + $0x10] sm:$0xff]
    %v538 = vld [vmem:[%s2 + $0x18] sm:$0xff]
    %v539 = vld [vmem:[%s2 + $0x20] sm:$0xff]
    %v540 = vld [vmem:[%s2 + $0x28] sm:$0xff]
    %v541 = vld [vmem:[%s2 + $0x30] sm:$0xff]
    %v542 = vld [vmem:[%s2 + $0x38] sm:$0xff]
    %v543 = vld [vmem:[%s2 + $0x40] sm:$0xff]
    %v544 = vld [vmem:[%s2 + $0x48] sm:$0xff]
    %v545 = vld [vmem:[%s2 + $0x50] sm:$0xff]
    %v546 = vld [vmem:[%s2 + $0x58] sm:$0xff]
    %v547 = vld [vmem:[%s2 + $0x60] sm:$0xff]
    %v548 = vld [vmem:[%s2 + $0x68] sm:$0xff]
    %v549 = vld [vmem:[%s2 + $0x70] sm:$0xff]
    %v550 = vld [vmem:[%s2 + $0x78] sm:$0xff]
    %v551 = vld [vmem:[%s2 + $0x80] sm:$0xff]
    %v552 = vld [vmem:[%s2 + $0x88] sm:$0xff]
    %v553 = vld [vmem:[%s2 + $0x90] sm:$0xff]
    %v554 = vld [vmem:[%s2 + $0x98] sm:$0xff]
    %v555 = vld [vmem:[%s2 + $0xa0] sm:$0xff]
    %v556 = vld [vmem:[%s2 + $0xa8] sm:$0xff]
    %v557 = vld [vmem:[%s2 + $0xb0] sm:$0xff]
    %v558 = vld [vmem:[%s2 + $0xb8] sm:$0xff]
    %v559 = vld [vmem:[%s2 + $0xc0] sm:$0xff]
    %v560 = vld [vmem:[%s2 + $0xc8] sm:$0xff]
    %v561 = vld [vmem:[%s2 + $0xd0] sm:$0xff]
    %v562 = vld [vmem:[%s2 + $0xd8] sm:$0xff]
    %v563 = vld [vmem:[%s2 + $0xe0] sm:$0xff]
    %v564 = vld [vmem:[%s2 + $0xe8] sm:$0xff]
    %v565 = vld [vmem:[%s2 + $0xf0] sm:$0xff]
    %v566 = vld [vmem:[%s2 + $0xf8] sm:$0xff]
    %568 = vset.pattern.permute.xlu0 0
    %569 = vperm.xlu0 %568, %v535
    %v570 = vpop.permute.xlu0 %569
    %573 = vset.pattern.permute.xlu0 0
    %574 = vperm.xlu0 %573, %v536
    %v575 = vpop.permute.xlu0 %574
    %578 = vset.pattern.permute.xlu0 0
    %579 = vperm.xlu0 %578, %v537
    %v580 = vpop.permute.xlu0 %579
    %583 = vset.pattern.permute.xlu0 0
    %584 = vperm.xlu0 %583, %v538
    %v585 = vpop.permute.xlu0 %584
    %588 = vset.pattern.permute.xlu0 0
    %589 = vperm.xlu0 %588, %v539
    %v590 = vpop.permute.xlu0 %589
    %593 = vset.pattern.permute.xlu0 0
    %594 = vperm.xlu0 %593, %v540
    %v595 = vpop.permute.xlu0 %594
    %598 = vset.pattern.permute.xlu0 0
    %599 = vperm.xlu0 %598, %v541
    %v600 = vpop.permute.xlu0 %599
    %603 = vset.pattern.permute.xlu0 0
    %604 = vperm.xlu0 %603, %v542
    %v605 = vpop.permute.xlu0 %604
    %608 = vset.pattern.permute.xlu0 0
    %609 = vperm.xlu0 %608, %v543
    %v610 = vpop.permute.xlu0 %609
    %613 = vset.pattern.permute.xlu0 0
    %614 = vperm.xlu0 %613, %v544
    %v615 = vpop.permute.xlu0 %614
    %618 = vset.pattern.permute.xlu0 0
    %619 = vperm.xlu0 %618, %v545
    %v620 = vpop.permute.xlu0 %619
    %623 = vset.pattern.permute.xlu0 0
    %624 = vperm.xlu0 %623, %v546
    %v625 = vpop.permute.xlu0 %624
    %628 = vset.pattern.permute.xlu0 0
    %629 = vperm.xlu0 %628, %v547
    %v630 = vpop.permute.xlu0 %629
    %633 = vset.pattern.permute.xlu0 0
    %634 = vperm.xlu0 %633, %v548
    %v635 = vpop.permute.xlu0 %634
    %638 = vset.pattern.permute.xlu0 0
    %639 = vperm.xlu0 %638, %v549
    %v640 = vpop.permute.xlu0 %639
    %643 = vset.pattern.permute.xlu0 0
    %644 = vperm.xlu0 %643, %v550
    %v645 = vpop.permute.xlu0 %644
    %648 = vset.pattern.permute.xlu0 0
    %649 = vperm.xlu0 %648, %v551
    %v650 = vpop.permute.xlu0 %649
    %653 = vset.pattern.permute.xlu0 0
    %654 = vperm.xlu0 %653, %v552
    %v655 = vpop.permute.xlu0 %654
    %658 = vset.pattern.permute.xlu0 0
    %659 = vperm.xlu0 %658, %v553
    %v660 = vpop.permute.xlu0 %659
    %663 = vset.pattern.permute.xlu0 0
    %664 = vperm.xlu0 %663, %v554
    %v665 = vpop.permute.xlu0 %664
    %668 = vset.pattern.permute.xlu0 0
    %669 = vperm.xlu0 %668, %v555
    %v670 = vpop.permute.xlu0 %669
    %673 = vset.pattern.permute.xlu0 0
    %674 = vperm.xlu0 %673, %v556
    %v675 = vpop.permute.xlu0 %674
    %678 = vset.pattern.permute.xlu0 0
    %679 = vperm.xlu0 %678, %v557
    %v680 = vpop.permute.xlu0 %679
    %683 = vset.pattern.permute.xlu0 0
    %684 = vperm.xlu0 %683, %v558
    %v685 = vpop.permute.xlu0 %684
    %688 = vset.pattern.permute.xlu0 0
    %689 = vperm.xlu0 %688, %v559
    %v690 = vpop.permute.xlu0 %689
    %693 = vset.pattern.permute.xlu0 0
    %694 = vperm.xlu0 %693, %v560
    %v695 = vpop.permute.xlu0 %694
    %698 = vset.pattern.permute.xlu0 0
    %699 = vperm.xlu0 %698, %v561
    %v700 = vpop.permute.xlu0 %699
    %703 = vset.pattern.permute.xlu0 0
    %704 = vperm.xlu0 %703, %v562
    %v705 = vpop.permute.xlu0 %704
    %708 = vset.pattern.permute.xlu0 0
    %709 = vperm.xlu0 %708, %v563
    %v710 = vpop.permute.xlu0 %709
    %713 = vset.pattern.permute.xlu0 0
    %714 = vperm.xlu0 %713, %v564
    %v715 = vpop.permute.xlu0 %714
    %718 = vset.pattern.permute.xlu0 0
    %719 = vperm.xlu0 %718, %v565
    %v720 = vpop.permute.xlu0 %719
    %723 = vset.pattern.permute.xlu0 0
    %724 = vperm.xlu0 %723, %v566
    %v725 = vpop.permute.xlu0 %724
    %v727 = vmul.f32 %v503, %v570
    %v728 = vmul.f32 %v504, %v575
    %v729 = vmul.f32 %v505, %v580
    %v730 = vmul.f32 %v506, %v585
    %v731 = vmul.f32 %v507, %v590
    %v732 = vmul.f32 %v508, %v595
    %v733 = vmul.f32 %v509, %v600
    %v734 = vmul.f32 %v510, %v605
    %v735 = vmul.f32 %v511, %v610
    %v736 = vmul.f32 %v512, %v615
    %v737 = vmul.f32 %v513, %v620
    %v738 = vmul.f32 %v514, %v625
    %v739 = vmul.f32 %v515, %v630
    %v740 = vmul.f32 %v516, %v635
    %v741 = vmul.f32 %v517, %v640
    %v742 = vmul.f32 %v518, %v645
    %v743 = vmul.f32 %v519, %v650
    %v744 = vmul.f32 %v520, %v655
    %v745 = vmul.f32 %v521, %v660
    %v746 = vmul.f32 %v522, %v665
    %v747 = vmul.f32 %v523, %v670
    %v748 = vmul.f32 %v524, %v675
    %v749 = vmul.f32 %v525, %v680
    %v750 = vmul.f32 %v526, %v685
    %v751 = vmul.f32 %v527, %v690
    %v752 = vmul.f32 %v528, %v695
    %v753 = vmul.f32 %v529, %v700
    %v754 = vmul.f32 %v530, %v705
    %v755 = vmul.f32 %v531, %v710
    %v756 = vmul.f32 %v532, %v715
    %v757 = vmul.f32 %v533, %v720
    %v758 = vmul.f32 %v534, %v725
    %v759 = vpack.c.bf16 %v728, %v727
    %v760 = vpack.c.bf16 %v730, %v729
    %v761 = vpack.c.bf16 %v732, %v731
    %v762 = vpack.c.bf16 %v734, %v733
    %v763 = vpack.c.bf16 %v736, %v735
    %v764 = vpack.c.bf16 %v738, %v737
    %v765 = vpack.c.bf16 %v740, %v739
    %v766 = vpack.c.bf16 %v742, %v741
    %v767 = vpack.c.bf16 %v744, %v743
    %v768 = vpack.c.bf16 %v746, %v745
    %v769 = vpack.c.bf16 %v748, %v747
    %v770 = vpack.c.bf16 %v750, %v749
    %v771 = vpack.c.bf16 %v752, %v751
    %v772 = vpack.c.bf16 %v754, %v753
    %v773 = vpack.c.bf16 %v756, %v755
    %v774 = vpack.c.bf16 %v758, %v757
    %v791 = vunpack.c.l.b16 %v759
    %v792 = vunpack.c.h.b16 %v759
    %v793 = vunpack.c.l.b16 %v760
    %v794 = vunpack.c.h.b16 %v760
    %v795 = vunpack.c.l.b16 %v761
    %v796 = vunpack.c.h.b16 %v761
    %v797 = vunpack.c.l.b16 %v762
    %v798 = vunpack.c.h.b16 %v762
    %v799 = vunpack.c.l.b16 %v763
    %v800 = vunpack.c.h.b16 %v763
    %v801 = vunpack.c.l.b16 %v764
    %v802 = vunpack.c.h.b16 %v764
    %v803 = vunpack.c.l.b16 %v765
    %v804 = vunpack.c.h.b16 %v765
    %v805 = vunpack.c.l.b16 %v766
    %v806 = vunpack.c.h.b16 %v766
    %v807 = vunpack.c.l.b16 %v767
    %v808 = vunpack.c.h.b16 %v767
    %v809 = vunpack.c.l.b16 %v768
    %v810 = vunpack.c.h.b16 %v768
    %v811 = vunpack.c.l.b16 %v769
    %v812 = vunpack.c.h.b16 %v769
    %v813 = vunpack.c.l.b16 %v770
    %v814 = vunpack.c.h.b16 %v770
    %v815 = vunpack.c.l.b16 %v771
    %v816 = vunpack.c.h.b16 %v771
    %v817 = vunpack.c.l.b16 %v772
    %v818 = vunpack.c.h.b16 %v772
    %v819 = vunpack.c.l.b16 %v773
    %v820 = vunpack.c.h.b16 %v773
    %v821 = vunpack.c.l.b16 %v774
    %v822 = vunpack.c.h.b16 %v774
    %v823 = vpack.c.b16 %v791, %v791
    %v824 = vpack.c.b16 %v792, %v792
    %v825 = vpack.c.b16 %v793, %v793
    %v826 = vpack.c.b16 %v794, %v794
    %v827 = vpack.c.b16 %v795, %v795
    %v828 = vpack.c.b16 %v796, %v796
    %v829 = vpack.c.b16 %v797, %v797
    %v830 = vpack.c.b16 %v798, %v798
    %v831 = vpack.c.b16 %v799, %v799
    %v832 = vpack.c.b16 %v800, %v800
    %v833 = vpack.c.b16 %v801, %v801
    %v834 = vpack.c.b16 %v802, %v802
    %v835 = vpack.c.b16 %v803, %v803
    %v836 = vpack.c.b16 %v804, %v804
    %v837 = vpack.c.b16 %v805, %v805
    %v838 = vpack.c.b16 %v806, %v806
    %v839 = vpack.c.b16 %v807, %v807
    %v840 = vpack.c.b16 %v808, %v808
    %v841 = vpack.c.b16 %v809, %v809
    %v842 = vpack.c.b16 %v810, %v810
    %v843 = vpack.c.b16 %v811, %v811
    %v844 = vpack.c.b16 %v812, %v812
    %v845 = vpack.c.b16 %v813, %v813
    %v846 = vpack.c.b16 %v814, %v814
    %v847 = vpack.c.b16 %v815, %v815
    %v848 = vpack.c.b16 %v816, %v816
    %v849 = vpack.c.b16 %v817, %v817
    %v850 = vpack.c.b16 %v818, %v818
    %v851 = vpack.c.b16 %v819, %v819
    %v852 = vpack.c.b16 %v820, %v820
    %v853 = vpack.c.b16 %v821, %v821
    %v854 = vpack.c.b16 %v822, %v822
    %887 = vst [vmem:[%s3] sm:$0xf] %v823
    %888 = vst [vmem:[%s3 + $0x4] sm:$0xf] %v824
    %889 = vst [vmem:[%s3 + $0x8] sm:$0xf] %v825
    %890 = vst [vmem:[%s3 + $0xc] sm:$0xf] %v826
    %891 = vst [vmem:[%s3 + $0x10] sm:$0xf] %v827
    %892 = vst [vmem:[%s3 + $0x14] sm:$0xf] %v828
    %893 = vst [vmem:[%s3 + $0x18] sm:$0xf] %v829
    %894 = vst [vmem:[%s3 + $0x1c] sm:$0xf] %v830
    %895 = vst [vmem:[%s3 + $0x20] sm:$0xf] %v831
    %896 = vst [vmem:[%s3 + $0x24] sm:$0xf] %v832
    %897 = vst [vmem:[%s3 + $0x28] sm:$0xf] %v833
    %898 = vst [vmem:[%s3 + $0x2c] sm:$0xf] %v834
    %899 = vst [vmem:[%s3 + $0x30] sm:$0xf] %v835
    %900 = vst [vmem:[%s3 + $0x34] sm:$0xf] %v836
    %901 = vst [vmem:[%s3 + $0x38] sm:$0xf] %v837
    %902 = vst [vmem:[%s3 + $0x3c] sm:$0xf] %v838
    %903 = vst [vmem:[%s3 + $0x40] sm:$0xf] %v839
    %904 = vst [vmem:[%s3 + $0x44] sm:$0xf] %v840
    %905 = vst [vmem:[%s3 + $0x48] sm:$0xf] %v841
    %906 = vst [vmem:[%s3 + $0x4c] sm:$0xf] %v842
    %907 = vst [vmem:[%s3 + $0x50] sm:$0xf] %v843
    %908 = vst [vmem:[%s3 + $0x54] sm:$0xf] %v844
    %909 = vst [vmem:[%s3 + $0x58] sm:$0xf] %v845
    %910 = vst [vmem:[%s3 + $0x5c] sm:$0xf] %v846
    %911 = vst [vmem:[%s3 + $0x60] sm:$0xf] %v847
    %912 = vst [vmem:[%s3 + $0x64] sm:$0xf] %v848
    %913 = vst [vmem:[%s3 + $0x68] sm:$0xf] %v849
    %914 = vst [vmem:[%s3 + $0x6c] sm:$0xf] %v850
    %915 = vst [vmem:[%s3 + $0x70] sm:$0xf] %v851
    %916 = vst [vmem:[%s3 + $0x74] sm:$0xf] %v852
    %917 = vst [vmem:[%s3 + $0x78] sm:$0xf] %v853
    %918 = vst [vmem:[%s3 + $0x7c] sm:$0xf] %v854
  $region21: #{gcn_for_emb_forward.4} parent=0 // pred_fallthru
    _
  // Predicated region
  $region22: #{gcn_for_emb_forward.4} parent=0 // pred_check
    _
  $region23: #{gcn_for_emb_forward.4} parent=0 // pred_check_branch
    %920 = sbr.rel (0) target = $region25
  $region24: #{gcn_for_emb_forward.4} parent=0 // pred_region
    _
  $region25: #{gcn_for_emb_forward.4} parent=0 // pred_fallthru
    _
  // Predicated region
  $region26: #{gcn_for_emb_forward.4} parent=0 // pred_check
    _
  $region27: #{gcn_for_emb_forward.4} parent=0 // pred_check_branch
    %922 = sbr.rel (0) target = $region29
  $region28: #{gcn_for_emb_forward.4} parent=0 // pred_region
    _
  $region29: #{gcn_for_emb_forward.4} parent=0 // pred_fallthru
    _

// kernel: gcn_for_emb_forward.5
$region0: #{gcn_for_emb_forward.5}
  #allocation0 [shape = 'u32[]', space=smem, size = 0x4, offset = 0x4, fixed_abs, tag = 'smem constant byte address 0x4 - core index']
  #allocation1 [shape = 'u32[144,128]{1,0:T(1,128)}', space=vmem, size = 0x12000, scoped, tag = 'internal scratch']
  #allocation2 [shape = 'f32[256,128]{1,0:T(8,128)}', space=vmem, size = 0x20000, scoped, tag = 'scratch operand']
  %s0 = inlined_call_operand.vmem [shape: bf16[256,256], index: 0, kind: input, shape index: {}]
  %s1 = inlined_call_operand.vmem [shape: bf16[256,128], index: 1, kind: input, shape index: {}]
  %s2 = inlined_call_operand.vmem [shape: f32[256,1], index: 2, kind: input, shape index: {}]
  %s3 = inlined_call_operand.vmem [shape: f32[1,128], index: 3, kind: input, shape index: {}]
  %s4 = inlined_call_operand.vmem [shape: bf16[256,128], index: 4, kind: output, shape index: {}]
  %s5 = sld [smem:[#allocation0]]
  $region34: #{gcn_for_emb_forward.5} parent=0
    _
  %s7 = ssub.s32 1, %s5
  %s8 = scalar_select 0, %s7, %s5
  // Predicated region
  $region2: #{gcn_for_emb_forward.5} parent=0 // pred_check
    _
  $region3: #{gcn_for_emb_forward.5} parent=0 // pred_check_branch
    %10 = sbr.rel (0) target = $region5
  $region4: #{gcn_for_emb_forward.5} parent=0 // pred_region
    _
  $region5: #{gcn_for_emb_forward.5} parent=0 // pred_fallthru
    _
  // Predicated region
  $region6: #{gcn_for_emb_forward.5} parent=0 // pred_check
    _
  $region7: #{gcn_for_emb_forward.5} parent=0 // pred_check_branch
    %12 = sbr.rel (0) target = $region9
  $region8: #{gcn_for_emb_forward.5} parent=0 // pred_region
    _
  $region9: #{gcn_for_emb_forward.5} parent=0 // pred_fallthru
    _
  // Predicated region
  $region10: #{gcn_for_emb_forward.5} parent=0 // pred_check
    _
  $region11: #{gcn_for_emb_forward.5} parent=0 // pred_check_branch
    %14 = sbr.rel (0) target = $region13
  $region12: #{gcn_for_emb_forward.5} parent=0 // pred_region
    _
  $region13: #{gcn_for_emb_forward.5} parent=0 // pred_fallthru
    _
  // Predicated region
  $region14: #{gcn_for_emb_forward.5} parent=0 // pred_check
    _
  $region15: #{gcn_for_emb_forward.5} parent=0 // pred_check_branch
    %16 = sbr.rel (0) target = $region17
  $region16: #{gcn_for_emb_forward.5} parent=0 // pred_region
    _
  $region17: #{gcn_for_emb_forward.5} parent=0 // pred_fallthru
    _
  %p18 = scmp.eq.s32.totalorder 0, 0
  // Predicated region
  $region18: #{gcn_for_emb_forward.5} parent=0 // pred_check
    %p19 = pneg %p18
  $region19: #{gcn_for_emb_forward.5} parent=0 // pred_check_branch
    %21 = sbr.rel (%p19) target = $region21
  $region20: #{gcn_for_emb_forward.5} parent=0 // pred_region
    %22 = vst [vmem:[#allocation2] sm:$0xff] 0.0
    %23 = vst [vmem:[#allocation2 + $0x8] sm:$0xff] 0.0
    %24 = vst [vmem:[#allocation2 + $0x10] sm:$0xff] 0.0
    %25 = vst [vmem:[#allocation2 + $0x18] sm:$0xff] 0.0
    %26 = vst [vmem:[#allocation2 + $0x20] sm:$0xff] 0.0
    %27 = vst [vmem:[#allocation2 + $0x28] sm:$0xff] 0.0
    %28 = vst [vmem:[#allocation2 + $0x30] sm:$0xff] 0.0
    %29 = vst [vmem:[#allocation2 + $0x38] sm:$0xff] 0.0
    %30 = vst [vmem:[#allocation2 + $0x40] sm:$0xff] 0.0
    %31 = vst [vmem:[#allocation2 + $0x48] sm:$0xff] 0.0
    %32 = vst [vmem:[#allocation2 + $0x50] sm:$0xff] 0.0
    %33 = vst [vmem:[#allocation2 + $0x58] sm:$0xff] 0.0
    %34 = vst [vmem:[#allocation2 + $0x60] sm:$0xff] 0.0
    %35 = vst [vmem:[#allocation2 + $0x68] sm:$0xff] 0.0
    %36 = vst [vmem:[#allocation2 + $0x70] sm:$0xff] 0.0
    %37 = vst [vmem:[#allocation2 + $0x78] sm:$0xff] 0.0
    %38 = vst [vmem:[#allocation2 + $0x80] sm:$0xff] 0.0
    %39 = vst [vmem:[#allocation2 + $0x88] sm:$0xff] 0.0
    %40 = vst [vmem:[#allocation2 + $0x90] sm:$0xff] 0.0
    %41 = vst [vmem:[#allocation2 + $0x98] sm:$0xff] 0.0
    %42 = vst [vmem:[#allocation2 + $0xa0] sm:$0xff] 0.0
    %43 = vst [vmem:[#allocation2 + $0xa8] sm:$0xff] 0.0
    %44 = vst [vmem:[#allocation2 + $0xb0] sm:$0xff] 0.0
    %45 = vst [vmem:[#allocation2 + $0xb8] sm:$0xff] 0.0
    %46 = vst [vmem:[#allocation2 + $0xc0] sm:$0xff] 0.0
    %47 = vst [vmem:[#allocation2 + $0xc8] sm:$0xff] 0.0
    %48 = vst [vmem:[#allocation2 + $0xd0] sm:$0xff] 0.0
    %49 = vst [vmem:[#allocation2 + $0xd8] sm:$0xff] 0.0
    %50 = vst [vmem:[#allocation2 + $0xe0] sm:$0xff] 0.0
    %51 = vst [vmem:[#allocation2 + $0xe8] sm:$0xff] 0.0
    %52 = vst [vmem:[#allocation2 + $0xf0] sm:$0xff] 0.0
    %53 = vst [vmem:[#allocation2 + $0xf8] sm:$0xff] 0.0
  $region21: #{gcn_for_emb_forward.5} parent=0 // pred_fallthru
    _
  %v54 = vld [vmem:[#allocation2] sm:$0xff]
  %v55 = vld [vmem:[#allocation2 + $0x8] sm:$0xff]
  %v56 = vld [vmem:[#allocation2 + $0x10] sm:$0xff]
  %v57 = vld [vmem:[#allocation2 + $0x18] sm:$0xff]
  %v58 = vld [vmem:[#allocation2 + $0x20] sm:$0xff]
  %v59 = vld [vmem:[#allocation2 + $0x28] sm:$0xff]
  %v60 = vld [vmem:[#allocation2 + $0x30] sm:$0xff]
  %v61 = vld [vmem:[#allocation2 + $0x38] sm:$0xff]
  %v62 = vld [vmem:[#allocation2 + $0x40] sm:$0xff]
  %v63 = vld [vmem:[#allocation2 + $0x48] sm:$0xff]
  %v64 = vld [vmem:[#allocation2 + $0x50] sm:$0xff]
  %v65 = vld [vmem:[#allocation2 + $0x58] sm:$0xff]
  %v66 = vld [vmem:[#allocation2 + $0x60] sm:$0xff]
  %v67 = vld [vmem:[#allocation2 + $0x68] sm:$0xff]
  %v68 = vld [vmem:[#allocation2 + $0x70] sm:$0xff]
  %v69 = vld [vmem:[#allocation2 + $0x78] sm:$0xff]
  %v70 = vld [vmem:[#allocation2 + $0x80] sm:$0xff]
  %v71 = vld [vmem:[#allocation2 + $0x88] sm:$0xff]
  %v72 = vld [vmem:[#allocation2 + $0x90] sm:$0xff]
  %v73 = vld [vmem:[#allocation2 + $0x98] sm:$0xff]
  %v74 = vld [vmem:[#allocation2 + $0xa0] sm:$0xff]
  %v75 = vld [vmem:[#allocation2 + $0xa8] sm:$0xff]
  %v76 = vld [vmem:[#allocation2 + $0xb0] sm:$0xff]
  %v77 = vld [vmem:[#allocation2 + $0xb8] sm:$0xff]
  %v78 = vld [vmem:[#allocation2 + $0xc0] sm:$0xff]
  %v79 = vld [vmem:[#allocation2 + $0xc8] sm:$0xff]
  %v80 = vld [vmem:[#allocation2 + $0xd0] sm:$0xff]
  %v81 = vld [vmem:[#allocation2 + $0xd8] sm:$0xff]
  %v82 = vld [vmem:[#allocation2 + $0xe0] sm:$0xff]
  %v83 = vld [vmem:[#allocation2 + $0xe8] sm:$0xff]
  %v84 = vld [vmem:[#allocation2 + $0xf0] sm:$0xff]
  %v85 = vld [vmem:[#allocation2 + $0xf8] sm:$0xff]
  %v86 = vld [vmem:[%s0] sm:$0xff]
  %v87 = vld [vmem:[%s0 + $0x8] sm:$0xff]
  %v88 = vld [vmem:[%s0 + $0x10] sm:$0xff]
  %v89 = vld [vmem:[%s0 + $0x18] sm:$0xff]
  %v90 = vld [vmem:[%s0 + $0x20] sm:$0xff]
  %v91 = vld [vmem:[%s0 + $0x28] sm:$0xff]
  %v92 = vld [vmem:[%s0 + $0x30] sm:$0xff]
  %v93 = vld [vmem:[%s0 + $0x38] sm:$0xff]
  %v94 = vld [vmem:[%s0 + $0x40] sm:$0xff]
  %v95 = vld [vmem:[%s0 + $0x48] sm:$0xff]
  %v96 = vld [vmem:[%s0 + $0x50] sm:$0xff]
  %v97 = vld [vmem:[%s0 + $0x58] sm:$0xff]
  %v98 = vld [vmem:[%s0 + $0x60] sm:$0xff]
  %v99 = vld [vmem:[%s0 + $0x68] sm:$0xff]
  %v100 = vld [vmem:[%s0 + $0x70] sm:$0xff]
  %v101 = vld [vmem:[%s0 + $0x78] sm:$0xff]
  %v102 = vld [vmem:[%s0 + $0x80] sm:$0xff]
  %v103 = vld [vmem:[%s0 + $0x88] sm:$0xff]
  %v104 = vld [vmem:[%s0 + $0x90] sm:$0xff]
  %v105 = vld [vmem:[%s0 + $0x98] sm:$0xff]
  %v106 = vld [vmem:[%s0 + $0xa0] sm:$0xff]
  %v107 = vld [vmem:[%s0 + $0xa8] sm:$0xff]
  %v108 = vld [vmem:[%s0 + $0xb0] sm:$0xff]
  %v109 = vld [vmem:[%s0 + $0xb8] sm:$0xff]
  %v110 = vld [vmem:[%s0 + $0xc0] sm:$0xff]
  %v111 = vld [vmem:[%s0 + $0xc8] sm:$0xff]
  %v112 = vld [vmem:[%s0 + $0xd0] sm:$0xff]
  %v113 = vld [vmem:[%s0 + $0xd8] sm:$0xff]
  %v114 = vld [vmem:[%s0 + $0xe0] sm:$0xff]
  %v115 = vld [vmem:[%s0 + $0xe8] sm:$0xff]
  %v116 = vld [vmem:[%s0 + $0xf0] sm:$0xff]
  %v117 = vld [vmem:[%s0 + $0xf8] sm:$0xff]
  %v118 = vld [vmem:[%s1] sm:$0xf]
  %v119 = vld [vmem:[%s1 + $0x4] sm:$0xf]
  %v120 = vld [vmem:[%s1 + $0x8] sm:$0xf]
  %v121 = vld [vmem:[%s1 + $0xc] sm:$0xf]
  %v122 = vld [vmem:[%s1 + $0x10] sm:$0xf]
  %v123 = vld [vmem:[%s1 + $0x14] sm:$0xf]
  %v124 = vld [vmem:[%s1 + $0x18] sm:$0xf]
  %v125 = vld [vmem:[%s1 + $0x1c] sm:$0xf]
  %v126 = vld [vmem:[%s1 + $0x20] sm:$0xf]
  %v127 = vld [vmem:[%s1 + $0x24] sm:$0xf]
  %v128 = vld [vmem:[%s1 + $0x28] sm:$0xf]
  %v129 = vld [vmem:[%s1 + $0x2c] sm:$0xf]
  %v130 = vld [vmem:[%s1 + $0x30] sm:$0xf]
  %v131 = vld [vmem:[%s1 + $0x34] sm:$0xf]
  %v132 = vld [vmem:[%s1 + $0x38] sm:$0xf]
  %v133 = vld [vmem:[%s1 + $0x3c] sm:$0xf]
  %v134 = vld [vmem:[%s1 + $0x40] sm:$0xf]
  %v135 = vld [vmem:[%s1 + $0x44] sm:$0xf]
  %v136 = vld [vmem:[%s1 + $0x48] sm:$0xf]
  %v137 = vld [vmem:[%s1 + $0x4c] sm:$0xf]
  %v138 = vld [vmem:[%s1 + $0x50] sm:$0xf]
  %v139 = vld [vmem:[%s1 + $0x54] sm:$0xf]
  %v140 = vld [vmem:[%s1 + $0x58] sm:$0xf]
  %v141 = vld [vmem:[%s1 + $0x5c] sm:$0xf]
  %v142 = vld [vmem:[%s1 + $0x60] sm:$0xf]
  %v143 = vld [vmem:[%s1 + $0x64] sm:$0xf]
  %v144 = vld [vmem:[%s1 + $0x68] sm:$0xf]
  %v145 = vld [vmem:[%s1 + $0x6c] sm:$0xf]
  %v146 = vld [vmem:[%s1 + $0x70] sm:$0xf]
  %v147 = vld [vmem:[%s1 + $0x74] sm:$0xf]
  %v148 = vld [vmem:[%s1 + $0x78] sm:$0xf]
  %v149 = vld [vmem:[%s1 + $0x7c] sm:$0xf]
  %v182 = vunpack.c.l.b16 %v86
  %v183 = vunpack.c.h.b16 %v86
  %v184 = vunpack.c.l.b16 %v87
  %v185 = vunpack.c.h.b16 %v87
  %v186 = vunpack.c.l.b16 %v88
  %v187 = vunpack.c.h.b16 %v88
  %v188 = vunpack.c.l.b16 %v89
  %v189 = vunpack.c.h.b16 %v89
  %v190 = vunpack.c.l.b16 %v90
  %v191 = vunpack.c.h.b16 %v90
  %v192 = vunpack.c.l.b16 %v91
  %v193 = vunpack.c.h.b16 %v91
  %v194 = vunpack.c.l.b16 %v92
  %v195 = vunpack.c.h.b16 %v92
  %v196 = vunpack.c.l.b16 %v93
  %v197 = vunpack.c.h.b16 %v93
  %v198 = vunpack.c.l.b16 %v94
  %v199 = vunpack.c.h.b16 %v94
  %v200 = vunpack.c.l.b16 %v95
  %v201 = vunpack.c.h.b16 %v95
  %v202 = vunpack.c.l.b16 %v96
  %v203 = vunpack.c.h.b16 %v96
  %v204 = vunpack.c.l.b16 %v97
  %v205 = vunpack.c.h.b16 %v97
  %v206 = vunpack.c.l.b16 %v98
  %v207 = vunpack.c.h.b16 %v98
  %v208 = vunpack.c.l.b16 %v99
  %v209 = vunpack.c.h.b16 %v99
  %v210 = vunpack.c.l.b16 %v100
  %v211 = vunpack.c.h.b16 %v100
  %v212 = vunpack.c.l.b16 %v101
  %v213 = vunpack.c.h.b16 %v101
  %v214 = vunpack.c.l.b16 %v102
  %v215 = vunpack.c.h.b16 %v102
  %v216 = vunpack.c.l.b16 %v103
  %v217 = vunpack.c.h.b16 %v103
  %v218 = vunpack.c.l.b16 %v104
  %v219 = vunpack.c.h.b16 %v104
  %v220 = vunpack.c.l.b16 %v105
  %v221 = vunpack.c.h.b16 %v105
  %v222 = vunpack.c.l.b16 %v106
  %v223 = vunpack.c.h.b16 %v106
  %v224 = vunpack.c.l.b16 %v107
  %v225 = vunpack.c.h.b16 %v107
  %v226 = vunpack.c.l.b16 %v108
  %v227 = vunpack.c.h.b16 %v108
  %v228 = vunpack.c.l.b16 %v109
  %v229 = vunpack.c.h.b16 %v109
  %v230 = vunpack.c.l.b16 %v110
  %v231 = vunpack.c.h.b16 %v110
  %v232 = vunpack.c.l.b16 %v111
  %v233 = vunpack.c.h.b16 %v111
  %v234 = vunpack.c.l.b16 %v112
  %v235 = vunpack.c.h.b16 %v112
  %v236 = vunpack.c.l.b16 %v113
  %v237 = vunpack.c.h.b16 %v113
  %v238 = vunpack.c.l.b16 %v114
  %v239 = vunpack.c.h.b16 %v114
  %v240 = vunpack.c.l.b16 %v115
  %v241 = vunpack.c.h.b16 %v115
  %v242 = vunpack.c.l.b16 %v116
  %v243 = vunpack.c.h.b16 %v116
  %v244 = vunpack.c.l.b16 %v117
  %v245 = vunpack.c.h.b16 %v117
  %v246 = vpack.c.b16 %v184, %v182
  %v247 = vpack.c.b16 %v185, %v183
  %v248 = vpack.c.b16 %v188, %v186
  %v249 = vpack.c.b16 %v189, %v187
  %v250 = vpack.c.b16 %v192, %v190
  %v251 = vpack.c.b16 %v193, %v191
  %v252 = vpack.c.b16 %v196, %v194
  %v253 = vpack.c.b16 %v197, %v195
  %v254 = vpack.c.b16 %v200, %v198
  %v255 = vpack.c.b16 %v201, %v199
  %v256 = vpack.c.b16 %v204, %v202
  %v257 = vpack.c.b16 %v205, %v203
  %v258 = vpack.c.b16 %v208, %v206
  %v259 = vpack.c.b16 %v209, %v207
  %v260 = vpack.c.b16 %v212, %v210
  %v261 = vpack.c.b16 %v213, %v211
  %v262 = vpack.c.b16 %v216, %v214
  %v263 = vpack.c.b16 %v217, %v215
  %v264 = vpack.c.b16 %v220, %v218
  %v265 = vpack.c.b16 %v221, %v219
  %v266 = vpack.c.b16 %v224, %v222
  %v267 = vpack.c.b16 %v225, %v223
  %v268 = vpack.c.b16 %v228, %v226
  %v269 = vpack.c.b16 %v229, %v227
  %v270 = vpack.c.b16 %v232, %v230
  %v271 = vpack.c.b16 %v233, %v231
  %v272 = vpack.c.b16 %v236, %v234
  %v273 = vpack.c.b16 %v237, %v235
  %v274 = vpack.c.b16 %v240, %v238
  %v275 = vpack.c.b16 %v241, %v239
  %v276 = vpack.c.b16 %v244, %v242
  %v277 = vpack.c.b16 %v245, %v243
  %v342 = vunpack.c.l.b16 %v118
  %v343 = vunpack.c.l.b16 %v119
  %v344 = vunpack.c.l.b16 %v120
  %v345 = vunpack.c.l.b16 %v121
  %v346 = vunpack.c.l.b16 %v122
  %v347 = vunpack.c.l.b16 %v123
  %v348 = vunpack.c.l.b16 %v124
  %v349 = vunpack.c.l.b16 %v125
  %v350 = vunpack.c.l.b16 %v126
  %v351 = vunpack.c.l.b16 %v127
  %v352 = vunpack.c.l.b16 %v128
  %v353 = vunpack.c.l.b16 %v129
  %v354 = vunpack.c.l.b16 %v130
  %v355 = vunpack.c.l.b16 %v131
  %v356 = vunpack.c.l.b16 %v132
  %v357 = vunpack.c.l.b16 %v133
  %v358 = vunpack.c.l.b16 %v134
  %v359 = vunpack.c.l.b16 %v135
  %v360 = vunpack.c.l.b16 %v136
  %v361 = vunpack.c.l.b16 %v137
  %v362 = vunpack.c.l.b16 %v138
  %v363 = vunpack.c.l.b16 %v139
  %v364 = vunpack.c.l.b16 %v140
  %v365 = vunpack.c.l.b16 %v141
  %v366 = vunpack.c.l.b16 %v142
  %v367 = vunpack.c.l.b16 %v143
  %v368 = vunpack.c.l.b16 %v144
  %v369 = vunpack.c.l.b16 %v145
  %v370 = vunpack.c.l.b16 %v146
  %v371 = vunpack.c.l.b16 %v147
  %v372 = vunpack.c.l.b16 %v148
  %v373 = vunpack.c.l.b16 %v149
  %v374 = vpack.c.b16 %v343, %v342
  %v375 = vpack.c.b16 %v345, %v344
  %v376 = vpack.c.b16 %v347, %v346
  %v377 = vpack.c.b16 %v349, %v348
  %v378 = vpack.c.b16 %v351, %v350
  %v379 = vpack.c.b16 %v353, %v352
  %v380 = vpack.c.b16 %v355, %v354
  %v381 = vpack.c.b16 %v357, %v356
  %v382 = vpack.c.b16 %v359, %v358
  %v383 = vpack.c.b16 %v361, %v360
  %v384 = vpack.c.b16 %v363, %v362
  %v385 = vpack.c.b16 %v365, %v364
  %v386 = vpack.c.b16 %v367, %v366
  %v387 = vpack.c.b16 %v369, %v368
  %v388 = vpack.c.b16 %v371, %v370
  %v389 = vpack.c.b16 %v373, %v372
  %406 = vmatprep.subr.bf16.mxu0 0
  %407 = vmatpush1.bf16.msra.mxu0 %v374
  %408 = vmatprep.subr.bf16.mxu0 0
  %409 = vmatpush1.bf16.msra.mxu0 %v375
  %410 = vmatprep.subr.bf16.mxu0 0
  %411 = vmatpush1.bf16.msra.mxu0 %v376
  %412 = vmatprep.subr.bf16.mxu0 0
  %413 = vmatpush1.bf16.msra.mxu0 %v377
  %414 = vmatprep.subr.bf16.mxu0 0
  %415 = vmatpush1.bf16.msra.mxu0 %v378
  %416 = vmatprep.subr.bf16.mxu0 0
  %417 = vmatpush1.bf16.msra.mxu0 %v379
  %418 = vmatprep.subr.bf16.mxu0 0
  %419 = vmatpush1.bf16.msra.mxu0 %v380
  %420 = vmatprep.subr.bf16.mxu0 0
  %421 = vmatpush1.bf16.msra.mxu0 %v381
  %422 = vmatprep.subr.bf16.mxu0 0
  %423 = vmatpush1.bf16.msra.mxu0 %v382
  %424 = vmatprep.subr.bf16.mxu0 0
  %425 = vmatpush1.bf16.msra.mxu0 %v383
  %426 = vmatprep.subr.bf16.mxu0 0
  %427 = vmatpush1.bf16.msra.mxu0 %v384
  %428 = vmatprep.subr.bf16.mxu0 0
  %429 = vmatpush1.bf16.msra.mxu0 %v385
  %430 = vmatprep.subr.bf16.mxu0 0
  %431 = vmatpush1.bf16.msra.mxu0 %v386
  %432 = vmatprep.subr.bf16.mxu0 0
  %433 = vmatpush1.bf16.msra.mxu0 %v387
  %434 = vmatprep.subr.bf16.mxu0 0
  %435 = vmatpush1.bf16.msra.mxu0 %v388
  %436 = vmatprep.subr.bf16.mxu0 0
  %437 = vmatpush1.bf16.msra.mxu0 %v389
  %438 = vmatprep.mubr.bf16.mxu0 %v247
  %439 = vmatmul.mubr.bf16.gmra.mrb[0].mxu0 %v246
  %v440 = vpop.f32.mrb[0].mxu0
  %v441 = vadd.f32 0.0, %v440
  %v442 = vpop.f32.mrb[0].mxu0
  %v443 = vpop.f32.mrb[0].mxu0
  %v444 = vadd.f32 0.0, %v443
  %v445 = vpop.f32.mrb[0].mxu0
  %446 = vmatprep.mubr.bf16.mxu0 %v249
  %447 = vmatmul.mubr.bf16.gmra.mrb[0].mxu0 %v248
  %v448 = vpop.f32.mrb[0].mxu0
  %v449 = vadd.f32 0.0, %v448
  %v450 = vpop.f32.mrb[0].mxu0
  %v451 = vpop.f32.mrb[0].mxu0
  %v452 = vadd.f32 0.0, %v451
  %v453 = vpop.f32.mrb[0].mxu0
  %454 = vmatprep.mubr.bf16.mxu0 %v251
  %455 = vmatmul.mubr.bf16.gmra.mrb[0].mxu0 %v250
  %v456 = vpop.f32.mrb[0].mxu0
  %v457 = vadd.f32 0.0, %v456
  %v458 = vpop.f32.mrb[0].mxu0
  %v459 = vpop.f32.mrb[0].mxu0
  %v460 = vadd.f32 0.0, %v459
  %v461 = vpop.f32.mrb[0].mxu0
  %462 = vmatprep.mubr.bf16.mxu0 %v253
  %463 = vmatmul.mubr.bf16.gmra.mrb[0].mxu0 %v252
  %v464 = vpop.f32.mrb[0].mxu0
  %v465 = vadd.f32 0.0, %v464
  %v466 = vpop.f32.mrb[0].mxu0
  %v467 = vpop.f32.mrb[0].mxu0
  %v468 = vadd.f32 0.0, %v467
  %v469 = vpop.f32.mrb[0].mxu0
  %470 = vmatprep.mubr.bf16.mxu0 %v255
  %471 = vmatmul.mubr.bf16.gmra.mrb[0].mxu0 %v254
  %v472 = vpop.f32.mrb[0].mxu0
  %v473 = vadd.f32 0.0, %v472
  %v474 = vpop.f32.mrb[0].mxu0
  %v475 = vpop.f32.mrb[0].mxu0
  %v476 = vadd.f32 0.0, %v475
  %v477 = vpop.f32.mrb[0].mxu0
  %478 = vmatprep.mubr.bf16.mxu0 %v257
  %479 = vmatmul.mubr.bf16.gmra.mrb[0].mxu0 %v256
  %v480 = vpop.f32.mrb[0].mxu0
  %v481 = vadd.f32 0.0, %v480
  %v482 = vpop.f32.mrb[0].mxu0
  %v483 = vpop.f32.mrb[0].mxu0
  %v484 = vadd.f32 0.0, %v483
  %v485 = vpop.f32.mrb[0].mxu0
  %486 = vmatprep.mubr.bf16.mxu0 %v259
  %487 = vmatmul.mubr.bf16.gmra.mrb[0].mxu0 %v258
  %v488 = vpop.f32.mrb[0].mxu0
  %v489 = vadd.f32 0.0, %v488
  %v490 = vpop.f32.mrb[0].mxu0
  %v491 = vpop.f32.mrb[0].mxu0
  %v492 = vadd.f32 0.0, %v491
  %v493 = vpop.f32.mrb[0].mxu0
  %494 = vmatprep.mubr.bf16.mxu0 %v261
  %495 = vmatmul.mubr.bf16.gmra.mrb[0].mxu0 %v260
  %v496 = vpop.f32.mrb[0].mxu0
  %v497 = vadd.f32 0.0, %v496
  %v498 = vpop.f32.mrb[0].mxu0
  %v499 = vpop.f32.mrb[0].mxu0
  %v500 = vadd.f32 0.0, %v499
  %v501 = vpop.f32.mrb[0].mxu0
  %502 = vmatprep.mubr.bf16.mxu0 %v263
  %503 = vmatmul.mubr.bf16.gmra.mrb[0].mxu0 %v262
  %v504 = vpop.f32.mrb[0].mxu0
  %v505 = vadd.f32 0.0, %v504
  %v506 = vpop.f32.mrb[0].mxu0
  %v507 = vpop.f32.mrb[0].mxu0
  %v508 = vadd.f32 0.0, %v507
  %v509 = vpop.f32.mrb[0].mxu0
  %510 = vmatprep.mubr.bf16.mxu0 %v265
  %511 = vmatmul.mubr.bf16.gmra.mrb[0].mxu0 %v264
  %v512 = vpop.f32.mrb[0].mxu0
  %v513 = vadd.f32 0.0, %v512
  %v514 = vpop.f32.mrb[0].mxu0
  %v515 = vpop.f32.mrb[0].mxu0
  %v516 = vadd.f32 0.0, %v515
  %v517 = vpop.f32.mrb[0].mxu0
  %518 = vmatprep.mubr.bf16.mxu0 %v267
  %519 = vmatmul.mubr.bf16.gmra.mrb[0].mxu0 %v266
  %v520 = vpop.f32.mrb[0].mxu0
  %v521 = vadd.f32 0.0, %v520
  %v522 = vpop.f32.mrb[0].mxu0
  %v523 = vpop.f32.mrb[0].mxu0
  %v524 = vadd.f32 0.0, %v523
  %v525 = vpop.f32.mrb[0].mxu0
  %526 = vmatprep.mubr.bf16.mxu0 %v269
  %527 = vmatmul.mubr.bf16.gmra.mrb[0].mxu0 %v268
  %v528 = vpop.f32.mrb[0].mxu0
  %v529 = vadd.f32 0.0, %v528
  %v530 = vpop.f32.mrb[0].mxu0
  %v531 = vpop.f32.mrb[0].mxu0
  %v532 = vadd.f32 0.0, %v531
  %v533 = vpop.f32.mrb[0].mxu0
  %534 = vmatprep.mubr.bf16.mxu0 %v271
  %535 = vmatmul.mubr.bf16.gmra.mrb[0].mxu0 %v270
  %v536 = vpop.f32.mrb[0].mxu0
  %v537 = vadd.f32 0.0, %v536
  %v538 = vpop.f32.mrb[0].mxu0
  %v539 = vpop.f32.mrb[0].mxu0
  %v540 = vadd.f32 0.0, %v539
  %v541 = vpop.f32.mrb[0].mxu0
  %542 = vmatprep.mubr.bf16.mxu0 %v273
  %543 = vmatmul.mubr.bf16.gmra.mrb[0].mxu0 %v272
  %v544 = vpop.f32.mrb[0].mxu0
  %v545 = vadd.f32 0.0, %v544
  %v546 = vpop.f32.mrb[0].mxu0
  %v547 = vpop.f32.mrb[0].mxu0
  %v548 = vadd.f32 0.0, %v547
  %v549 = vpop.f32.mrb[0].mxu0
  %550 = vmatprep.mubr.bf16.mxu0 %v275
  %551 = vmatmul.mubr.bf16.gmra.mrb[0].mxu0 %v274
  %v552 = vpop.f32.mrb[0].mxu0
  %v553 = vadd.f32 0.0, %v552
  %v554 = vpop.f32.mrb[0].mxu0
  %v555 = vpop.f32.mrb[0].mxu0
  %v556 = vadd.f32 0.0, %v555
  %v557 = vpop.f32.mrb[0].mxu0
  %558 = vmatprep.mubr.bf16.mxu0 %v277
  %559 = vmatmul.mubr.bf16.gmra.mrb[0].mxu0 %v276
  %v560 = vpop.f32.mrb[0].mxu0
  %v561 = vadd.f32 0.0, %v560
  %v562 = vpop.f32.mrb[0].mxu0
  %v563 = vpop.f32.mrb[0].mxu0
  %v564 = vadd.f32 0.0, %v563
  %v565 = vpop.f32.mrb[0].mxu0
  %566 = vdwg.mxu0
  %v567 = vadd.f32 %v54, %v441
  %v568 = vadd.f32 %v55, %v444
  %v569 = vadd.f32 %v56, %v449
  %v570 = vadd.f32 %v57, %v452
  %v571 = vadd.f32 %v58, %v457
  %v572 = vadd.f32 %v59, %v460
  %v573 = vadd.f32 %v60, %v465
  %v574 = vadd.f32 %v61, %v468
  %v575 = vadd.f32 %v62, %v473
  %v576 = vadd.f32 %v63, %v476
  %v577 = vadd.f32 %v64, %v481
  %v578 = vadd.f32 %v65, %v484
  %v579 = vadd.f32 %v66, %v489
  %v580 = vadd.f32 %v67, %v492
  %v581 = vadd.f32 %v68, %v497
  %v582 = vadd.f32 %v69, %v500
  %v583 = vadd.f32 %v70, %v505
  %v584 = vadd.f32 %v71, %v508
  %v585 = vadd.f32 %v72, %v513
  %v586 = vadd.f32 %v73, %v516
  %v587 = vadd.f32 %v74, %v521
  %v588 = vadd.f32 %v75, %v524
  %v589 = vadd.f32 %v76, %v529
  %v590 = vadd.f32 %v77, %v532
  %v591 = vadd.f32 %v78, %v537
  %v592 = vadd.f32 %v79, %v540
  %v593 = vadd.f32 %v80, %v545
  %v594 = vadd.f32 %v81, %v548
  %v595 = vadd.f32 %v82, %v553
  %v596 = vadd.f32 %v83, %v556
  %v597 = vadd.f32 %v84, %v561
  %v598 = vadd.f32 %v85, %v564
  %599 = vst [vmem:[#allocation2] sm:$0xff] %v567
  %600 = vst [vmem:[#allocation2 + $0x8] sm:$0xff] %v568
  %601 = vst [vmem:[#allocation2 + $0x10] sm:$0xff] %v569
  %602 = vst [vmem:[#allocation2 + $0x18] sm:$0xff] %v570
  %603 = vst [vmem:[#allocation2 + $0x20] sm:$0xff] %v571
  %604 = vst [vmem:[#allocation2 + $0x28] sm:$0xff] %v572
  %605 = vst [vmem:[#allocation2 + $0x30] sm:$0xff] %v573
  %606 = vst [vmem:[#allocation2 + $0x38] sm:$0xff] %v574
  %607 = vst [vmem:[#allocation2 + $0x40] sm:$0xff] %v575
  %608 = vst [vmem:[#allocation2 + $0x48] sm:$0xff] %v576
  %609 = vst [vmem:[#allocation2 + $0x50] sm:$0xff] %v577
  %610 = vst [vmem:[#allocation2 + $0x58] sm:$0xff] %v578
  %611 = vst [vmem:[#allocation2 + $0x60] sm:$0xff] %v579
  %612 = vst [vmem:[#allocation2 + $0x68] sm:$0xff] %v580
  %613 = vst [vmem:[#allocation2 + $0x70] sm:$0xff] %v581
  %614 = vst [vmem:[#allocation2 + $0x78] sm:$0xff] %v582
  %615 = vst [vmem:[#allocation2 + $0x80] sm:$0xff] %v583
  %616 = vst [vmem:[#allocation2 + $0x88] sm:$0xff] %v584
  %617 = vst [vmem:[#allocation2 + $0x90] sm:$0xff] %v585
  %618 = vst [vmem:[#allocation2 + $0x98] sm:$0xff] %v586
  %619 = vst [vmem:[#allocation2 + $0xa0] sm:$0xff] %v587
  %620 = vst [vmem:[#allocation2 + $0xa8] sm:$0xff] %v588
  %621 = vst [vmem:[#allocation2 + $0xb0] sm:$0xff] %v589
  %622 = vst [vmem:[#allocation2 + $0xb8] sm:$0xff] %v590
  %623 = vst [vmem:[#allocation2 + $0xc0] sm:$0xff] %v591
  %624 = vst [vmem:[#allocation2 + $0xc8] sm:$0xff] %v592
  %625 = vst [vmem:[#allocation2 + $0xd0] sm:$0xff] %v593
  %626 = vst [vmem:[#allocation2 + $0xd8] sm:$0xff] %v594
  %627 = vst [vmem:[#allocation2 + $0xe0] sm:$0xff] %v595
  %628 = vst [vmem:[#allocation2 + $0xe8] sm:$0xff] %v596
  %629 = vst [vmem:[#allocation2 + $0xf0] sm:$0xff] %v597
  %630 = vst [vmem:[#allocation2 + $0xf8] sm:$0xff] %v598
  // Predicated region
  $region22: #{gcn_for_emb_forward.5} parent=0 // pred_check
    %p631 = pneg %p18
  $region23: #{gcn_for_emb_forward.5} parent=0 // pred_check_branch
    %633 = sbr.rel (%p631) target = $region25
  $region24: #{gcn_for_emb_forward.5} parent=0 // pred_region
    %v634 = vld [vmem:[#allocation2] sm:$0xff]
    %v635 = vld [vmem:[#allocation2 + $0x8] sm:$0xff]
    %v636 = vld [vmem:[#allocation2 + $0x10] sm:$0xff]
    %v637 = vld [vmem:[#allocation2 + $0x18] sm:$0xff]
    %v638 = vld [vmem:[#allocation2 + $0x20] sm:$0xff]
    %v639 = vld [vmem:[#allocation2 + $0x28] sm:$0xff]
    %v640 = vld [vmem:[#allocation2 + $0x30] sm:$0xff]
    %v641 = vld [vmem:[#allocation2 + $0x38] sm:$0xff]
    %v642 = vld [vmem:[#allocation2 + $0x40] sm:$0xff]
    %v643 = vld [vmem:[#allocation2 + $0x48] sm:$0xff]
    %v644 = vld [vmem:[#allocation2 + $0x50] sm:$0xff]
    %v645 = vld [vmem:[#allocation2 + $0x58] sm:$0xff]
    %v646 = vld [vmem:[#allocation2 + $0x60] sm:$0xff]
    %v647 = vld [vmem:[#allocation2 + $0x68] sm:$0xff]
    %v648 = vld [vmem:[#allocation2 + $0x70] sm:$0xff]
    %v649 = vld [vmem:[#allocation2 + $0x78] sm:$0xff]
    %v650 = vld [vmem:[#allocation2 + $0x80] sm:$0xff]
    %v651 = vld [vmem:[#allocation2 + $0x88] sm:$0xff]
    %v652 = vld [vmem:[#allocation2 + $0x90] sm:$0xff]
    %v653 = vld [vmem:[#allocation2 + $0x98] sm:$0xff]
    %v654 = vld [vmem:[#allocation2 + $0xa0] sm:$0xff]
    %v655 = vld [vmem:[#allocation2 + $0xa8] sm:$0xff]
    %v656 = vld [vmem:[#allocation2 + $0xb0] sm:$0xff]
    %v657 = vld [vmem:[#allocation2 + $0xb8] sm:$0xff]
    %v658 = vld [vmem:[#allocation2 + $0xc0] sm:$0xff]
    %v659 = vld [vmem:[#allocation2 + $0xc8] sm:$0xff]
    %v660 = vld [vmem:[#allocation2 + $0xd0] sm:$0xff]
    %v661 = vld [vmem:[#allocation2 + $0xd8] sm:$0xff]
    %v662 = vld [vmem:[#allocation2 + $0xe0] sm:$0xff]
    %v663 = vld [vmem:[#allocation2 + $0xe8] sm:$0xff]
    %v664 = vld [vmem:[#allocation2 + $0xf0] sm:$0xff]
    %v665 = vld [vmem:[#allocation2 + $0xf8] sm:$0xff]
    %v666 = vld [vmem:[%s2] sm:$0xff]
    %v667 = vld [vmem:[%s2 + $0x8] sm:$0xff]
    %v668 = vld [vmem:[%s2 + $0x10] sm:$0xff]
    %v669 = vld [vmem:[%s2 + $0x18] sm:$0xff]
    %v670 = vld [vmem:[%s2 + $0x20] sm:$0xff]
    %v671 = vld [vmem:[%s2 + $0x28] sm:$0xff]
    %v672 = vld [vmem:[%s2 + $0x30] sm:$0xff]
    %v673 = vld [vmem:[%s2 + $0x38] sm:$0xff]
    %v674 = vld [vmem:[%s2 + $0x40] sm:$0xff]
    %v675 = vld [vmem:[%s2 + $0x48] sm:$0xff]
    %v676 = vld [vmem:[%s2 + $0x50] sm:$0xff]
    %v677 = vld [vmem:[%s2 + $0x58] sm:$0xff]
    %v678 = vld [vmem:[%s2 + $0x60] sm:$0xff]
    %v679 = vld [vmem:[%s2 + $0x68] sm:$0xff]
    %v680 = vld [vmem:[%s2 + $0x70] sm:$0xff]
    %v681 = vld [vmem:[%s2 + $0x78] sm:$0xff]
    %v682 = vld [vmem:[%s2 + $0x80] sm:$0xff]
    %v683 = vld [vmem:[%s2 + $0x88] sm:$0xff]
    %v684 = vld [vmem:[%s2 + $0x90] sm:$0xff]
    %v685 = vld [vmem:[%s2 + $0x98] sm:$0xff]
    %v686 = vld [vmem:[%s2 + $0xa0] sm:$0xff]
    %v687 = vld [vmem:[%s2 + $0xa8] sm:$0xff]
    %v688 = vld [vmem:[%s2 + $0xb0] sm:$0xff]
    %v689 = vld [vmem:[%s2 + $0xb8] sm:$0xff]
    %v690 = vld [vmem:[%s2 + $0xc0] sm:$0xff]
    %v691 = vld [vmem:[%s2 + $0xc8] sm:$0xff]
    %v692 = vld [vmem:[%s2 + $0xd0] sm:$0xff]
    %v693 = vld [vmem:[%s2 + $0xd8] sm:$0xff]
    %v694 = vld [vmem:[%s2 + $0xe0] sm:$0xff]
    %v695 = vld [vmem:[%s2 + $0xe8] sm:$0xff]
    %v696 = vld [vmem:[%s2 + $0xf0] sm:$0xff]
    %v697 = vld [vmem:[%s2 + $0xf8] sm:$0xff]
    %699 = vset.pattern.permute.xlu0 0
    %700 = vperm.xlu0 %699, %v666
    %v701 = vpop.permute.xlu0 %700
    %704 = vset.pattern.permute.xlu0 0
    %705 = vperm.xlu0 %704, %v667
    %v706 = vpop.permute.xlu0 %705
    %709 = vset.pattern.permute.xlu0 0
    %710 = vperm.xlu0 %709, %v668
    %v711 = vpop.permute.xlu0 %710
    %714 = vset.pattern.permute.xlu0 0
    %715 = vperm.xlu0 %714, %v669
    %v716 = vpop.permute.xlu0 %715
    %719 = vset.pattern.permute.xlu0 0
    %720 = vperm.xlu0 %719, %v670
    %v721 = vpop.permute.xlu0 %720
    %724 = vset.pattern.permute.xlu0 0
    %725 = vperm.xlu0 %724, %v671
    %v726 = vpop.permute.xlu0 %725
    %729 = vset.pattern.permute.xlu0 0
    %730 = vperm.xlu0 %729, %v672
    %v731 = vpop.permute.xlu0 %730
    %734 = vset.pattern.permute.xlu0 0
    %735 = vperm.xlu0 %734, %v673
    %v736 = vpop.permute.xlu0 %735
    %739 = vset.pattern.permute.xlu0 0
    %740 = vperm.xlu0 %739, %v674
    %v741 = vpop.permute.xlu0 %740
    %744 = vset.pattern.permute.xlu0 0
    %745 = vperm.xlu0 %744, %v675
    %v746 = vpop.permute.xlu0 %745
    %749 = vset.pattern.permute.xlu0 0
    %750 = vperm.xlu0 %749, %v676
    %v751 = vpop.permute.xlu0 %750
    %754 = vset.pattern.permute.xlu0 0
    %755 = vperm.xlu0 %754, %v677
    %v756 = vpop.permute.xlu0 %755
    %759 = vset.pattern.permute.xlu0 0
    %760 = vperm.xlu0 %759, %v678
    %v761 = vpop.permute.xlu0 %760
    %764 = vset.pattern.permute.xlu0 0
    %765 = vperm.xlu0 %764, %v679
    %v766 = vpop.permute.xlu0 %765
    %769 = vset.pattern.permute.xlu0 0
    %770 = vperm.xlu0 %769, %v680
    %v771 = vpop.permute.xlu0 %770
    %774 = vset.pattern.permute.xlu0 0
    %775 = vperm.xlu0 %774, %v681
    %v776 = vpop.permute.xlu0 %775
    %779 = vset.pattern.permute.xlu0 0
    %780 = vperm.xlu0 %779, %v682
    %v781 = vpop.permute.xlu0 %780
    %784 = vset.pattern.permute.xlu0 0
    %785 = vperm.xlu0 %784, %v683
    %v786 = vpop.permute.xlu0 %785
    %789 = vset.pattern.permute.xlu0 0
    %790 = vperm.xlu0 %789, %v684
    %v791 = vpop.permute.xlu0 %790
    %794 = vset.pattern.permute.xlu0 0
    %795 = vperm.xlu0 %794, %v685
    %v796 = vpop.permute.xlu0 %795
    %799 = vset.pattern.permute.xlu0 0
    %800 = vperm.xlu0 %799, %v686
    %v801 = vpop.permute.xlu0 %800
    %804 = vset.pattern.permute.xlu0 0
    %805 = vperm.xlu0 %804, %v687
    %v806 = vpop.permute.xlu0 %805
    %809 = vset.pattern.permute.xlu0 0
    %810 = vperm.xlu0 %809, %v688
    %v811 = vpop.permute.xlu0 %810
    %814 = vset.pattern.permute.xlu0 0
    %815 = vperm.xlu0 %814, %v689
    %v816 = vpop.permute.xlu0 %815
    %819 = vset.pattern.permute.xlu0 0
    %820 = vperm.xlu0 %819, %v690
    %v821 = vpop.permute.xlu0 %820
    %824 = vset.pattern.permute.xlu0 0
    %825 = vperm.xlu0 %824, %v691
    %v826 = vpop.permute.xlu0 %825
    %829 = vset.pattern.permute.xlu0 0
    %830 = vperm.xlu0 %829, %v692
    %v831 = vpop.permute.xlu0 %830
    %834 = vset.pattern.permute.xlu0 0
    %835 = vperm.xlu0 %834, %v693
    %v836 = vpop.permute.xlu0 %835
    %839 = vset.pattern.permute.xlu0 0
    %840 = vperm.xlu0 %839, %v694
    %v841 = vpop.permute.xlu0 %840
    %844 = vset.pattern.permute.xlu0 0
    %845 = vperm.xlu0 %844, %v695
    %v846 = vpop.permute.xlu0 %845
    %849 = vset.pattern.permute.xlu0 0
    %850 = vperm.xlu0 %849, %v696
    %v851 = vpop.permute.xlu0 %850
    %854 = vset.pattern.permute.xlu0 0
    %855 = vperm.xlu0 %854, %v697
    %v856 = vpop.permute.xlu0 %855
    %v858 = vmul.f32 %v634, %v701
    %v859 = vmul.f32 %v635, %v706
    %v860 = vmul.f32 %v636, %v711
    %v861 = vmul.f32 %v637, %v716
    %v862 = vmul.f32 %v638, %v721
    %v863 = vmul.f32 %v639, %v726
    %v864 = vmul.f32 %v640, %v731
    %v865 = vmul.f32 %v641, %v736
    %v866 = vmul.f32 %v642, %v741
    %v867 = vmul.f32 %v643, %v746
    %v868 = vmul.f32 %v644, %v751
    %v869 = vmul.f32 %v645, %v756
    %v870 = vmul.f32 %v646, %v761
    %v871 = vmul.f32 %v647, %v766
    %v872 = vmul.f32 %v648, %v771
    %v873 = vmul.f32 %v649, %v776
    %v874 = vmul.f32 %v650, %v781
    %v875 = vmul.f32 %v651, %v786
    %v876 = vmul.f32 %v652, %v791
    %v877 = vmul.f32 %v653, %v796
    %v878 = vmul.f32 %v654, %v801
    %v879 = vmul.f32 %v655, %v806
    %v880 = vmul.f32 %v656, %v811
    %v881 = vmul.f32 %v657, %v816
    %v882 = vmul.f32 %v658, %v821
    %v883 = vmul.f32 %v659, %v826
    %v884 = vmul.f32 %v660, %v831
    %v885 = vmul.f32 %v661, %v836
    %v886 = vmul.f32 %v662, %v841
    %v887 = vmul.f32 %v663, %v846
    %v888 = vmul.f32 %v664, %v851
    %v889 = vmul.f32 %v665, %v856
    %v890 = vld [vmem:[%s3] sm:$0x1]
    %v892 = vlaneseq
    %v893 = vshrl.u32 %v892, 7
    %v894 = vsub.s32 0, %v893
    %v895 = vrot.slane %v890, %v894
    %v897 = vadd.f32 %v858, %v895
    %v898 = vadd.f32 %v859, %v895
    %v899 = vadd.f32 %v860, %v895
    %v900 = vadd.f32 %v861, %v895
    %v901 = vadd.f32 %v862, %v895
    %v902 = vadd.f32 %v863, %v895
    %v903 = vadd.f32 %v864, %v895
    %v904 = vadd.f32 %v865, %v895
    %v905 = vadd.f32 %v866, %v895
    %v906 = vadd.f32 %v867, %v895
    %v907 = vadd.f32 %v868, %v895
    %v908 = vadd.f32 %v869, %v895
    %v909 = vadd.f32 %v870, %v895
    %v910 = vadd.f32 %v871, %v895
    %v911 = vadd.f32 %v872, %v895
    %v912 = vadd.f32 %v873, %v895
    %v913 = vadd.f32 %v874, %v895
    %v914 = vadd.f32 %v875, %v895
    %v915 = vadd.f32 %v876, %v895
    %v916 = vadd.f32 %v877, %v895
    %v917 = vadd.f32 %v878, %v895
    %v918 = vadd.f32 %v879, %v895
    %v919 = vadd.f32 %v880, %v895
    %v920 = vadd.f32 %v881, %v895
    %v921 = vadd.f32 %v882, %v895
    %v922 = vadd.f32 %v883, %v895
    %v923 = vadd.f32 %v884, %v895
    %v924 = vadd.f32 %v885, %v895
    %v925 = vadd.f32 %v886, %v895
    %v926 = vadd.f32 %v887, %v895
    %v927 = vadd.f32 %v888, %v895
    %v928 = vadd.f32 %v889, %v895
    %v929 = vmax.f32 %v897, 0.0
    %v930 = vmax.f32 %v898, 0.0
    %v931 = vmax.f32 %v899, 0.0
    %v932 = vmax.f32 %v900, 0.0
    %v933 = vmax.f32 %v901, 0.0
    %v934 = vmax.f32 %v902, 0.0
    %v935 = vmax.f32 %v903, 0.0
    %v936 = vmax.f32 %v904, 0.0
    %v937 = vmax.f32 %v905, 0.0
    %v938 = vmax.f32 %v906, 0.0
    %v939 = vmax.f32 %v907, 0.0
    %v940 = vmax.f32 %v908, 0.0
    %v941 = vmax.f32 %v909, 0.0
    %v942 = vmax.f32 %v910, 0.0
    %v943 = vmax.f32 %v911, 0.0
    %v944 = vmax.f32 %v912, 0.0
    %v945 = vmax.f32 %v913, 0.0
    %v946 = vmax.f32 %v914, 0.0
    %v947 = vmax.f32 %v915, 0.0
    %v948 = vmax.f32 %v916, 0.0
    %v949 = vmax.f32 %v917, 0.0
    %v950 = vmax.f32 %v918, 0.0
    %v951 = vmax.f32 %v919, 0.0
    %v952 = vmax.f32 %v920, 0.0
    %v953 = vmax.f32 %v921, 0.0
    %v954 = vmax.f32 %v922, 0.0
    %v955 = vmax.f32 %v923, 0.0
    %v956 = vmax.f32 %v924, 0.0
    %v957 = vmax.f32 %v925, 0.0
    %v958 = vmax.f32 %v926, 0.0
    %v959 = vmax.f32 %v927, 0.0
    %v960 = vmax.f32 %v928, 0.0
    %v961 = vpack.c.bf16 %v930, %v929
    %v962 = vpack.c.bf16 %v932, %v931
    %v963 = vpack.c.bf16 %v934, %v933
    %v964 = vpack.c.bf16 %v936, %v935
    %v965 = vpack.c.bf16 %v938, %v937
    %v966 = vpack.c.bf16 %v940, %v939
    %v967 = vpack.c.bf16 %v942, %v941
    %v968 = vpack.c.bf16 %v944, %v943
    %v969 = vpack.c.bf16 %v946, %v945
    %v970 = vpack.c.bf16 %v948, %v947
    %v971 = vpack.c.bf16 %v950, %v949
    %v972 = vpack.c.bf16 %v952, %v951
    %v973 = vpack.c.bf16 %v954, %v953
    %v974 = vpack.c.bf16 %v956, %v955
    %v975 = vpack.c.bf16 %v958, %v957
    %v976 = vpack.c.bf16 %v960, %v959
    %v993 = vunpack.c.l.b16 %v961
    %v994 = vunpack.c.h.b16 %v961
    %v995 = vunpack.c.l.b16 %v962
    %v996 = vunpack.c.h.b16 %v962
    %v997 = vunpack.c.l.b16 %v963
    %v998 = vunpack.c.h.b16 %v963
    %v999 = vunpack.c.l.b16 %v964
    %v1000 = vunpack.c.h.b16 %v964
    %v1001 = vunpack.c.l.b16 %v965
    %v1002 = vunpack.c.h.b16 %v965
    %v1003 = vunpack.c.l.b16 %v966
    %v1004 = vunpack.c.h.b16 %v966
    %v1005 = vunpack.c.l.b16 %v967
    %v1006 = vunpack.c.h.b16 %v967
    %v1007 = vunpack.c.l.b16 %v968
    %v1008 = vunpack.c.h.b16 %v968
    %v1009 = vunpack.c.l.b16 %v969
    %v1010 = vunpack.c.h.b16 %v969
    %v1011 = vunpack.c.l.b16 %v970
    %v1012 = vunpack.c.h.b16 %v970
    %v1013 = vunpack.c.l.b16 %v971
    %v1014 = vunpack.c.h.b16 %v971
    %v1015 = vunpack.c.l.b16 %v972
    %v1016 = vunpack.c.h.b16 %v972
    %v1017 = vunpack.c.l.b16 %v973
    %v1018 = vunpack.c.h.b16 %v973
    %v1019 = vunpack.c.l.b16 %v974
    %v1020 = vunpack.c.h.b16 %v974
    %v1021 = vunpack.c.l.b16 %v975
    %v1022 = vunpack.c.h.b16 %v975
    %v1023 = vunpack.c.l.b16 %v976
    %v1024 = vunpack.c.h.b16 %v976
    %v1025 = vpack.c.b16 %v993, %v993
    %v1026 = vpack.c.b16 %v994, %v994
    %v1027 = vpack.c.b16 %v995, %v995
    %v1028 = vpack.c.b16 %v996, %v996
    %v1029 = vpack.c.b16 %v997, %v997
    %v1030 = vpack.c.b16 %v998, %v998
    %v1031 = vpack.c.b16 %v999, %v999
    %v1032 = vpack.c.b16 %v1000, %v1000
    %v1033 = vpack.c.b16 %v1001, %v1001
    %v1034 = vpack.c.b16 %v1002, %v1002
    %v1035 = vpack.c.b16 %v1003, %v1003
    %v1036 = vpack.c.b16 %v1004, %v1004
    %v1037 = vpack.c.b16 %v1005, %v1005
    %v1038 = vpack.c.b16 %v1006, %v1006
    %v1039 = vpack.c.b16 %v1007, %v1007
    %v1040 = vpack.c.b16 %v1008, %v1008
    %v1041 = vpack.c.b16 %v1009, %v1009
    %v1042 = vpack.c.b16 %v1010, %v1010
    %v1043 = vpack.c.b16 %v1011, %v1011
    %v1044 = vpack.c.b16 %v1012, %v1012
    %v1045 = vpack.c.b16 %v1013, %v1013
    %v1046 = vpack.c.b16 %v1014, %v1014
    %v1047 = vpack.c.b16 %v1015, %v1015
    %v1048 = vpack.c.b16 %v1016, %v1016
    %v1049 = vpack.c.b16 %v1017, %v1017
    %v1050 = vpack.c.b16 %v1018, %v1018
    %v1051 = vpack.c.b16 %v1019, %v1019
    %v1052 = vpack.c.b16 %v1020, %v1020
    %v1053 = vpack.c.b16 %v1021, %v1021
    %v1054 = vpack.c.b16 %v1022, %v1022
    %v1055 = vpack.c.b16 %v1023, %v1023
    %v1056 = vpack.c.b16 %v1024, %v1024
    %1089 = vst [vmem:[%s4] sm:$0xf] %v1025
    %1090 = vst [vmem:[%s4 + $0x4] sm:$0xf] %v1026
    %1091 = vst [vmem:[%s4 + $0x8] sm:$0xf] %v1027
    %1092 = vst [vmem:[%s4 + $0xc] sm:$0xf] %v1028
    %1093 = vst [vmem:[%s4 + $0x10] sm:$0xf] %v1029
    %1094 = vst [vmem:[%s4 + $0x14] sm:$0xf] %v1030
    %1095 = vst [vmem:[%s4 + $0x18] sm:$0xf] %v1031
    %1096 = vst [vmem:[%s4 + $0x1c] sm:$0xf] %v1032
    %1097 = vst [vmem:[%s4 + $0x20] sm:$0xf] %v1033
    %1098 = vst [vmem:[%s4 + $0x24] sm:$0xf] %v1034
    %1099 = vst [vmem:[%s4 + $0x28] sm:$0xf] %v1035
    %1100 = vst [vmem:[%s4 + $0x2c] sm:$0xf] %v1036
    %1101 = vst [vmem:[%s4 + $0x30] sm:$0xf] %v1037
    %1102 = vst [vmem:[%s4 + $0x34] sm:$0xf] %v1038
    %1103 = vst [vmem:[%s4 + $0x38] sm:$0xf] %v1039
    %1104 = vst [vmem:[%s4 + $0x3c] sm:$0xf] %v1040
    %1105 = vst [vmem:[%s4 + $0x40] sm:$0xf] %v1041
    %1106 = vst [vmem:[%s4 + $0x44] sm:$0xf] %v1042
    %1107 = vst [vmem:[%s4 + $0x48] sm:$0xf] %v1043
    %1108 = vst [vmem:[%s4 + $0x4c] sm:$0xf] %v1044
    %1109 = vst [vmem:[%s4 + $0x50] sm:$0xf] %v1045
    %1110 = vst [vmem:[%s4 + $0x54] sm:$0xf] %v1046
    %1111 = vst [vmem:[%s4 + $0x58] sm:$0xf] %v1047
    %1112 = vst [vmem:[%s4 + $0x5c] sm:$0xf] %v1048
    %1113 = vst [vmem:[%s4 + $0x60] sm:$0xf] %v1049
    %1114 = vst [vmem:[%s4 + $0x64] sm:$0xf] %v1050
    %1115 = vst [vmem:[%s4 + $0x68] sm:$0xf] %v1051
    %1116 = vst [vmem:[%s4 + $0x6c] sm:$0xf] %v1052
    %1117 = vst [vmem:[%s4 + $0x70] sm:$0xf] %v1053
    %1118 = vst [vmem:[%s4 + $0x74] sm:$0xf] %v1054
    %1119 = vst [vmem:[%s4 + $0x78] sm:$0xf] %v1055
    %1120 = vst [vmem:[%s4 + $0x7c] sm:$0xf] %v1056
  $region25: #{gcn_for_emb_forward.5} parent=0 // pred_fallthru
    _
  // Predicated region
  $region26: #{gcn_for_emb_forward.5} parent=0 // pred_check
    _
  $region27: #{gcn_for_emb_forward.5} parent=0 // pred_check_branch
    %1122 = sbr.rel (0) target = $region29
  $region28: #{gcn_for_emb_forward.5} parent=0 // pred_region
    _
  $region29: #{gcn_for_emb_forward.5} parent=0 // pred_fallthru
    _
  // Predicated region
  $region30: #{gcn_for_emb_forward.5} parent=0 // pred_check
    _
  $region31: #{gcn_for_emb_forward.5} parent=0 // pred_check_branch
    %1124 = sbr.rel (0) target = $region33
  $region32: #{gcn_for_emb_forward.5} parent=0 // pred_region
    _
  $region33: #{gcn_for_emb_forward.5} parent=0 // pred_fallthru
    _

</llo_original>
